<compile_context>
chip_gen: v5e
topology: v5e:2x2
jax: 0.10.0
libtpu: 0.0.40
codegen_flags: <defaults>
</compile_context>

<pallas_src>
import functools

import jax
import jax.numpy as jnp
from jax.experimental import pallas as pl
from jax.experimental.pallas import tpu as pltpu

F32_EPS = float(jnp.finfo(jnp.float32).eps)
_HI = jax.lax.Precision.HIGHEST


# ----------------------------------------------------------------------------
# Kernel: per (batch-block, N-block) grid step.
#   a_l: (bt, Cl, V)  a_k: (bt, Ck, V)  c/pos: (bt, 1, V)
#   bias: (bt, Cl+Ck+1, 1)   [b_l ; b_k ; sum(c*pos)]
#   neg: (bt, nt, V)
#   out: (bt, 1, 128)  [lane 0 = loss_pos, 1 = loss_neg, 2 = loss_var]
# ----------------------------------------------------------------------------
def _ilp_loss_kernel(a_l_ref, a_k_ref, c_ref, pos_ref, bias_ref, neg_ref,
                     out_ref, num_ref, den_ref,
                     *, pos_margin, neg_margin, temp, known_c):
    f32 = jnp.float32
    bt, cl, v = a_l_ref.shape
    ck = a_k_ref.shape[1]
    ct = cl + ck + 1
    j = pl.program_id(1)
    last_j = pl.num_programs(1) - 1

    a_l = a_l_ref[...]                          # (bt, Cl, V)
    a_k = a_k_ref[...]                          # (bt, Ck, V)
    c = c_ref[...]                              # (bt, 1, V)
    pos = pos_ref[...]                          # (bt, 1, V)
    neg = neg_ref[...]                          # (bt, nt, V)
    b_l = bias_ref[:, 0:cl, :]                  # (bt, Cl, 1)
    b_k = bias_ref[:, cl:cl + ck, :]            # (bt, Ck, 1)
    cost_b = bias_ref[:, cl + ck:ct, :]         # (bt, 1, 1)

    inv_l = jax.lax.rsqrt(jnp.sum(a_l * a_l, axis=2, keepdims=True))   # (bt,Cl,1)
    sumsq_c = jnp.sum(c * c, axis=2, keepdims=True)                    # (bt,1,1)

    # --- distances, N on lanes: (bt, C, nt) = A @ neg^T ----------------------
    d_l = jnp.einsum("bcv,bnv->bcn", a_l, neg,
                     preferred_element_type=f32)                       # (bt,Cl,nt)
    dist_neg_l = (d_l + b_l) * inv_l
    d_k = jnp.einsum("bcv,bnv->bcn", a_k, neg,
                     preferred_element_type=f32, precision=_HI)        # (bt,Ck,nt)
    fdist_neg_k = d_k + b_k
    d_c = jnp.einsum("bcv,bnv->bcn", c, neg,
                     preferred_element_type=f32, precision=_HI)        # (bt,1,nt)
    dist_cost_raw = cost_b - d_c                                       # (bt,1,nt)

    # --- masks, directly in the N-on-lanes layout -----------------------------
    min_k = jnp.min(fdist_neg_k, axis=1, keepdims=True)                # (bt,1,nt)
    if known_c:
        min_k = jnp.minimum(min_k, dist_cost_raw)
    msk_known = jnp.where(min_k >= 0.0, 1.0, 0.0)

    ind = jnp.where(neg != pos, 1.0, 0.0)                              # (bt,nt,V)
    ones_row = jnp.ones((bt, 1, v), f32)
    cnt = jnp.einsum("bov,bnv->bon", ones_row, ind,
                     preferred_element_type=f32)                       # (bt,1,nt)
    msk_pos = jnp.where(cnt > 0.5, 1.0, 0.0)
    msk = msk_pos * msk_known                                          # (bt,1,nt)

    # --- softmin / hard-argmin weighted hinge over learnable constraints -----
    hinge_l = jnp.maximum(neg_margin + dist_neg_l, 0.0)                # (bt,Cl,nt)
    if known_c:
        if temp <= F32_EPS:
            mn = jnp.min(dist_neg_l, axis=1, keepdims=True)
            row = jax.lax.broadcasted_iota(f32, dist_neg_l.shape, 1)
            first = jnp.min(jnp.where(dist_neg_l == mn, row, float(cl)),
                            axis=1, keepdims=True)
            inner = jnp.sum(jnp.where(row == first, hinge_l, 0.0),
                            axis=1, keepdims=True)
        else:
            s = dist_neg_l * (-1.0 / temp)
            e = jnp.exp(s - jnp.max(s, axis=1, keepdims=True))
            inner = jnp.sum(e * hinge_l, axis=1, keepdims=True) * pl.reciprocal(
                jnp.sum(e, axis=1, keepdims=True), approx=True)
    else:
        inv_c = jax.lax.rsqrt(sumsq_c)              # unclamped (matches norm_l)
        dist_cost = dist_cost_raw * inv_c                              # (bt,1,nt)
        hinge_c = jnp.maximum(neg_margin + dist_cost, 0.0)
        if temp <= F32_EPS:
            mn_l = jnp.min(dist_neg_l, axis=1, keepdims=True)
            row = jax.lax.broadcasted_iota(f32, dist_neg_l.shape, 1)
            first = jnp.min(jnp.where(dist_neg_l == mn_l, row, float(cl)),
                            axis=1, keepdims=True)
            h_first = jnp.sum(jnp.where(row == first, hinge_l, 0.0),
                              axis=1, keepdims=True)
            # cost row is the LAST constraint -> ties resolve to the learnable block
            inner = jnp.where(dist_cost < mn_l, hinge_c, h_first)
        else:
            s_l = dist_neg_l * (-1.0 / temp)
            s_c = dist_cost * (-1.0 / temp)
            m = jnp.maximum(jnp.max(s_l, axis=1, keepdims=True), s_c)
            e_l = jnp.exp(s_l - m)
            e_c = jnp.exp(s_c - m)
            sum_e = jnp.sum(e_l, axis=1, keepdims=True) + e_c
            sum_eh = jnp.sum(e_l * hinge_l, axis=1, keepdims=True) + e_c * hinge_c
            inner = sum_eh * pl.reciprocal(sum_e, approx=True)

    # --- accumulate masked num / den over this N tile --------------------------
    num_t = jnp.sum(msk * inner, axis=2, keepdims=True)                # (bt,1,1)
    den_t = jnp.sum(msk, axis=2, keepdims=True)

    @pl.when(j == 0)
    def _():
        num_ref[...] = jnp.zeros_like(num_ref)
        den_ref[...] = jnp.zeros_like(den_ref)

    num_ref[...] += num_t
    den_ref[...] += den_t

    # --- finalize on the last N step -------------------------------------------
    @pl.when(j == last_j)
    def _():
        loss_neg = num_ref[...] * pl.reciprocal(den_ref[...] + F32_EPS,
                                                approx=True)           # (bt,1,1)

        # loss_pos: mean hinge over the Cl (non-cost) learnable constraints
        dist_pos_l = (jnp.sum(a_l * pos, axis=2, keepdims=True) + b_l) * inv_l
        loss_pos = jnp.sum(jnp.maximum(pos_margin - dist_pos_l, 0.0),
                           axis=1, keepdims=True) * (1.0 / cl)         # (bt,1,1)

        # loss_var: mean over all Ct normalized constraint rows, squared, meaned
        inv_k = jax.lax.rsqrt(
            jnp.maximum(jnp.sum(a_k * a_k, axis=2, keepdims=True), 1e-24))
        if known_c:
            inv_cv = jax.lax.rsqrt(jnp.maximum(sumsq_c, 1e-24))  # F.normalize clamp
        else:
            inv_cv = jax.lax.rsqrt(sumsq_c)                      # norm_l (unclamped)
        sum_rows = (jnp.sum(a_l * inv_l, axis=1, keepdims=True)
                    + jnp.sum(a_k * inv_k, axis=1, keepdims=True)
                    - c * inv_cv)                                       # (bt,1,V)
        mean_vec = sum_rows * (1.0 / ct)
        loss_var = jnp.sum(mean_vec * mean_vec, axis=2, keepdims=True) * (1.0 / v)

        lane = jax.lax.broadcasted_iota(jnp.int32, out_ref.shape, 2)    # (bt,1,128)
        out_ref[...] = (jnp.where(lane == 0, loss_pos, 0.0)
                        + jnp.where(lane == 1, loss_neg, 0.0)
                        + jnp.where(lane == 2, loss_var, 0.0))


# ----------------------------------------------------------------------------
# Tiling helpers + wrapper
# ----------------------------------------------------------------------------
def _round_up(x, m):
    return ((x + m - 1) // m) * m


def _per_batch_item_vmem_bytes(cl, ck, ct, v, nt):
    """Rough per-batch-element VMEM footprint: double-buffered input/output
    blocks plus the dominant in-kernel intermediates (bytes)."""
    lane_v = _round_up(v, 128)
    lane_n = _round_up(nt, 128)
    in_b = 4 * (_round_up(cl, 8) * lane_v          # a_l
                + _round_up(ck, 8) * lane_v        # a_k
                + 2 * 8 * lane_v                   # c, pos
                + _round_up(ct, 8) * 128           # packed biases
                + _round_up(nt, 8) * lane_v)       # neg
    out_b = 4 * 8 * 128
    work_b = 4 * (6 * _round_up(max(cl, ck) + 2, 8) * lane_n   # dist/hinge/exp/mask
                  + 2 * _round_up(nt, 8) * lane_v              # (neg != pos) indicator
                  + 2 * (_round_up(cl, 8) + _round_up(ck, 8)) * lane_v)
    return 2 * (in_b + out_b) + work_b


def ilp_loss_pallas(a, b, c, pos, neg, *, pos_margin, neg_margin, temp,
                    known_c=True, balancer_weights=None,
                    batch_tile=None, neg_tile=None):
    a_l, a_k = a
    b_l, b_k = b
    f32 = jnp.float32
    a_l = a_l.astype(f32)
    a_k = a_k.astype(f32)
    b_l = b_l.astype(f32)
    b_k = b_k.astype(f32)
    c = c.astype(f32)
    pos = pos.astype(f32)
    neg = neg.astype(f32)

    B, Cl, V = a_l.shape
    Ck = a_k.shape[1]
    N = neg.shape[1]
    Ct = Cl + Ck + 1
    # TODO(synk): zero-sized constraint blocks (ZeroABEncoder) would need a
    # trivially satisfied padding constraint; this kernel assumes Cl, Ck >= 1.
    assert Cl >= 1 and Ck >= 1 and N >= 1

    # TODO(synk): torch picks known_c via c.requires_grad / c.grad_fn; static flag here.
    cost_b = jnp.sum(c * pos, axis=-1, keepdims=True)                 # (B, 1)
    bias = jnp.concatenate([b_l, b_k, cost_b], axis=-1)[:, :, None]   # (B, Ct, 1)
    c3 = c[:, None, :]
    pos3 = pos[:, None, :]

    # --- per-generation VMEM budget (v7x: 64 MiB/TC, v5e/v6e: 128 MiB) --------
    try:
        vmem_cap = int(pltpu.get_tpu_info().vmem_capacity_bytes)
    except Exception:
        vmem_cap = 128 * 1024 * 1024
    vmem_limit = max(32 * 1024 * 1024,
                     min(int(vmem_cap * 0.80), 100 * 1024 * 1024))
    budget = int(vmem_limit * 0.85)

    # --- N tile: largest divisor of N (multiple of 8, or N itself) that fits --
    if neg_tile is not None:
        nt = int(neg_tile)
        assert N % nt == 0 and (nt == N or nt % 8 == 0)
    else:
        nt = N
        if _per_batch_item_vmem_bytes(Cl, Ck, Ct, V, nt) > budget:
            cands = sorted([d for d in range(8, N, 8) if N % d == 0],
                           reverse=True)
            for d in cands:
                if _per_batch_item_vmem_bytes(Cl, Ck, Ct, V, d) <= budget:
                    nt = d
                    break
            else:
                nt = cands[-1] if cands else N

    per_item = _per_batch_item_vmem_bytes(Cl, Ck, Ct, V, nt)

    # --- batch tile: largest divisor of B that fits; prefer an even grid >= 2 -
    if batch_tile is not None:
        bt = int(batch_tile)
        assert B % bt == 0, "batch_tile must divide the batch size"
    else:
        divisors = [d for d in range(1, B + 1) if B % d == 0]
        fitting = [d for d in divisors if d * per_item <= budget] or [1]
        bt = max(fitting,
                 key=lambda d: (int((B // d) >= 2 and (B // d) % 2 == 0), d))

    grid = (B // bt, N // nt)

    kernel = functools.partial(
        _ilp_loss_kernel,
        pos_margin=float(pos_margin),
        neg_margin=float(neg_margin),
        temp=float(temp),
        known_c=bool(known_c))

    out = pl.pallas_call(
        kernel,
        out_shape=jax.ShapeDtypeStruct((B, 1, 128), f32),
        grid=grid,
        in_specs=[
            pl.BlockSpec((bt, Cl, V), lambda i, j: (i, 0, 0)),
            pl.BlockSpec((bt, Ck, V), lambda i, j: (i, 0, 0)),
            pl.BlockSpec((bt, 1, V), lambda i, j: (i, 0, 0)),
            pl.BlockSpec((bt, 1, V), lambda i, j: (i, 0, 0)),
            pl.BlockSpec((bt, Ct, 1), lambda i, j: (i, 0, 0)),
            # TODO(synk): sweep pipeline_mode=pl.Buffered(3) on this streaming
            # input if a trace shows exposed DMA time.
            pl.BlockSpec((bt, nt, V), lambda i, j: (i, j, 0)),
        ],
        out_specs=pl.BlockSpec((bt, 1, 128), lambda i, j: (i, 0, 0)),
        scratch_shapes=[
            pltpu.VMEM((bt, 1, 1), f32),   # loss_neg numerator accumulator
            pltpu.VMEM((bt, 1, 1), f32),   # loss_neg denominator accumulator
        ],
        compiler_params=pltpu.CompilerParams(
            dimension_semantics=("parallel", "arbitrary"),
            vmem_limit_bytes=vmem_limit,
        ),
    )(a_l, a_k, c3, pos3, bias, neg)

    loss_pos = jnp.mean(out[:, 0, 0])
    loss_neg = jnp.mean(out[:, 0, 1])
    loss_var = jnp.mean(out[:, 0, 2])

    # TODO(synk): `balancer` is an arbitrary nn.Module in torch; deterministic
    # fixed-weight sum here.
    if balancer_weights is None:
        balancer_weights = {"pos": 1.0, "neg": 1.0, "var": 1.0}
    total = (balancer_weights["pos"] * loss_pos
             + balancer_weights["neg"] * loss_neg
             + balancer_weights["var"] * loss_var)
    return total, {"pos": loss_pos, "neg": loss_neg, "var": loss_var}


# ----------------------------------------------------------------------------
# Pure-JAX reference (mirrors the torch forward) for correctness checking.
# ----------------------------------------------------------------------------
def ilp_loss_ref(a, b, c, pos, neg, *, pos_margin, neg_margin, temp,
                 known_c=True, balancer_weights=None):
    a_l, a_k = a
    b_l, b_k = b
    cost_b = jnp.sum(c * pos, axis=-1, keepdims=True)
    if known_c:
        a_k = jnp.concatenate([a_k, -c[:, None, :]], axis=-2)
        b_k = jnp.concatenate([b_k, cost_b], axis=-1)
    else:
        a_l = jnp.concatenate([a_l, -c[:, None, :]], axis=-2)
        b_l = jnp.concatenate([b_l, cost_b], axis=-1)

    norm_l = jnp.sqrt(jnp.sum(a_l * a_l, axis=-1))
    a_ln = a_l / norm_l[..., :, None]
    b_ln = b_l / norm_l

    dist_pos_l = jnp.sum(a_ln * pos[:, None, :], axis=-1) + b_ln
    dist_neg_l = jnp.matmul(neg, jnp.swapaxes(a_ln, -1, -2),
                            precision=_HI) + b_ln[:, None, :]
    fdist_neg_k = jnp.matmul(neg, jnp.swapaxes(a_k, -1, -2),
                             precision=_HI) + b_k[:, None, :]

    msk_pos = jnp.any(neg != pos[:, None, :], axis=-1)
    msk_known = jnp.all(fdist_neg_k >= 0, axis=-1)
    msk = (msk_pos & msk_known).astype(jnp.float32)

    if known_c:
        loss_pos = jnp.mean(jax.nn.relu(pos_margin - dist_pos_l), axis=-1)
    elif dist_pos_l.shape[-1] > 1:
        loss_pos = jnp.mean(jax.nn.relu(pos_margin - dist_pos_l[..., :-1]),
                            axis=-1)
    else:
        loss_pos = jnp.zeros((a_l.shape[0],))

    if temp <= F32_EPS:
        w = jax.nn.one_hot(jnp.argmin(dist_neg_l, axis=-1),
                           dist_neg_l.shape[-1], dtype=jnp.float32)
    else:
        w = jax.nn.softmax(-dist_neg_l / temp, axis=-1)

    loss_neg = jnp.sum(
        msk * jnp.sum(w * jax.nn.relu(neg_margin + dist_neg_l), axis=-1),
        axis=-1) / (jnp.sum(msk, axis=-1) + F32_EPS)

    a_kn = a_k / jnp.maximum(
        jnp.sqrt(jnp.sum(a_k * a_k, axis=-1, keepdims=True)), 1e-12)
    a_lk = jnp.concatenate([a_ln, a_kn], axis=-2)
    loss_var = jnp.mean(jnp.mean(a_lk, axis=-2) ** 2, axis=-1)

    parts = {"pos": jnp.mean(loss_pos), "neg": jnp.mean(loss_neg),
             "var": jnp.mean(loss_var)}
    if balancer_weights is None:
        balancer_weights = {"pos": 1.0, "neg": 1.0, "var": 1.0}
    total = (balancer_weights["pos"] * parts["pos"]
             + balancer_weights["neg"] * parts["neg"]
             + balancer_weights["var"] * parts["var"])
    return total, parts


if __name__ == "__main__":
    key = jax.random.PRNGKey(0)
    B, V, Cl, Ck, N = 2, 32, 8, 4, 16
    ks = jax.random.split(key, 7)
    a_l = jax.random.normal(ks[0], (B, Cl, V), jnp.float32)
    # Integer-valued known constraints / cost and half-integer b_k keep the
    # known-feasibility threshold well away from 0, so the mask is robust to
    # any matmul precision choice.
    a_k = jax.random.randint(ks[1], (B, Ck, V), -3, 4).astype(jnp.float32)
    b_l = jax.random.normal(ks[2], (B, Cl), jnp.float32)
    b_k = jax.random.randint(ks[3], (B, Ck), 0, 9).astype(jnp.float32) + 0.5
    c = jax.random.randint(ks[4], (B, V), -3, 4).astype(jnp.float32)
    pos = (jax.random.uniform(ks[5], (B, V)) > 0.5).astype(jnp.float32)
    neg = (jax.random.uniform(ks[6], (B, N, V)) > 0.5).astype(jnp.float32)

    pos_margin, neg_margin = 0.1, 0.1

    ok = True
    # (known_c, temp, batch_tile, neg_tile) — covers softmin & argmin paths,
    # the learnable-cost path, and the N-tiled accumulator path.
    for known_c, temp, bt, ntile in [(True, 1.0, None, None),
                                     (True, 0.0, 1, 8),
                                     (False, 1.0, 2, None)]:
        total, parts = ilp_loss_pallas((a_l, a_k), (b_l, b_k), c, pos, neg,
                                       pos_margin=pos_margin,
                                       neg_margin=neg_margin,
                                       temp=temp, known_c=known_c,
                                       batch_tile=bt, neg_tile=ntile)
        total = jax.block_until_ready(total)
        ref_total, ref_parts = ilp_loss_ref((a_l, a_k), (b_l, b_k), c, pos, neg,
                                            pos_margin=pos_margin,
                                            neg_margin=neg_margin,
                                            temp=temp, known_c=known_c)
        ref_total = jax.block_until_ready(ref_total)
        good = jnp.allclose(total, ref_total, rtol=5e-3, atol=5e-3)
        for k in ("pos", "neg", "var"):
            good = good & jnp.allclose(parts[k], ref_parts[k],
                                       rtol=5e-3, atol=5e-3)
        if not bool(good):
            ok = False
            print("MISMATCH", known_c, temp, bt, ntile,
                  float(total), float(ref_total),
                  {k: float(parts[k]) for k in parts},
                  {k: float(ref_parts[k]) for k in ref_parts})

    if ok:
        print("KERNEL_OK")
</pallas_src>

<mosaic_0001>
module attributes {stable_mosaic.version = 11 : i64} {
  func.func @_ilp_loss_kernel(%arg0: i32, %arg1: i32, %arg2: memref<1x8x32xf32, #tpu.memory_space<vmem>>, %arg3: memref<1x4x32xf32, #tpu.memory_space<vmem>>, %arg4: memref<1x1x32xf32, #tpu.memory_space<vmem>>, %arg5: memref<1x1x32xf32, #tpu.memory_space<vmem>>, %arg6: memref<1x13x1xf32, #tpu.memory_space<vmem>>, %arg7: memref<1x16x32xf32, #tpu.memory_space<vmem>>, %arg8: memref<1x1x128xf32, #tpu.memory_space<vmem>>, %arg9: memref<1x1x1xf32, #tpu.memory_space<vmem>>, %arg10: memref<1x1x1xf32, #tpu.memory_space<vmem>>) attributes {dimension_semantics = [#tpu.dimension_semantics<parallel>, #tpu.dimension_semantics<arbitrary>], iteration_bounds = array<i64: 2, 1>, scalar_prefetch = 0 : i64, scratch_operands = 2 : i64, tpu.core_type = #tpu.core_type<tc>, window_params = [{transform_indices = @transform_0, window_bounds = array<i64: 1, 8, 32>}, {transform_indices = @transform_1, window_bounds = array<i64: 1, 4, 32>}, {transform_indices = @transform_2, window_bounds = array<i64: 1, 1, 32>}, {transform_indices = @transform_3, window_bounds = array<i64: 1, 1, 32>}, {transform_indices = @transform_4, window_bounds = array<i64: 1, 13, 1>}, {transform_indices = @transform_5, window_bounds = array<i64: 1, 16, 32>}, {transform_indices = @transform_6, window_bounds = array<i64: 1, 1, 128>}]} {
    %c0 = arith.constant 0 : index
    %c0_0 = arith.constant 0 : index
    %c0_1 = arith.constant 0 : index
    %0 = vector.load %arg2[%c0, %c0_0, %c0_1] : memref<1x8x32xf32, #tpu.memory_space<vmem>>, vector<1x8x32xf32>
    %c0_2 = arith.constant 0 : index
    %c0_3 = arith.constant 0 : index
    %c0_4 = arith.constant 0 : index
    %1 = vector.load %arg3[%c0_2, %c0_3, %c0_4] : memref<1x4x32xf32, #tpu.memory_space<vmem>>, vector<1x4x32xf32>
    %c0_5 = arith.constant 0 : index
    %c0_6 = arith.constant 0 : index
    %c0_7 = arith.constant 0 : index
    %2 = vector.load %arg4[%c0_5, %c0_6, %c0_7] : memref<1x1x32xf32, #tpu.memory_space<vmem>>, vector<1x1x32xf32>
    %c0_8 = arith.constant 0 : index
    %c0_9 = arith.constant 0 : index
    %c0_10 = arith.constant 0 : index
    %3 = vector.load %arg5[%c0_8, %c0_9, %c0_10] : memref<1x1x32xf32, #tpu.memory_space<vmem>>, vector<1x1x32xf32>
    %c0_11 = arith.constant 0 : index
    %c0_12 = arith.constant 0 : index
    %c0_13 = arith.constant 0 : index
    %4 = vector.load %arg7[%c0_11, %c0_12, %c0_13] : memref<1x16x32xf32, #tpu.memory_space<vmem>>, vector<1x16x32xf32>
    %c0_14 = arith.constant 0 : index
    %c0_15 = arith.constant 0 : index
    %c0_16 = arith.constant 0 : index
    %5 = vector.load %arg6[%c0_14, %c0_15, %c0_16] : memref<1x13x1xf32, #tpu.memory_space<vmem>>, vector<1x8x1xf32>
    %c0_17 = arith.constant 0 : index
    %c8 = arith.constant 8 : index
    %c0_18 = arith.constant 0 : index
    %6 = vector.load %arg6[%c0_17, %c8, %c0_18] : memref<1x13x1xf32, #tpu.memory_space<vmem>>, vector<1x4x1xf32>
    %c0_19 = arith.constant 0 : index
    %c12 = arith.constant 12 : index
    %c0_20 = arith.constant 0 : index
    %7 = vector.load %arg6[%c0_19, %c12, %c0_20] : memref<1x13x1xf32, #tpu.memory_space<vmem>>, vector<1x1x1xf32>
    %8 = arith.mulf %0, %0 : vector<1x8x32xf32>
    %cst = arith.constant dense<0.000000e+00> : vector<1x8xf32>
    %9 = vector.multi_reduction <add>, %8, %cst [2] : vector<1x8x32xf32> to vector<1x8xf32>
    %10 = vector.shape_cast %9 : vector<1x8xf32> to vector<1x8x1xf32>
    %11 = math.rsqrt %10 : vector<1x8x1xf32>
    %12 = arith.mulf %2, %2 : vector<1x1x32xf32>
    %cst_21 = arith.constant dense<0.000000e+00> : vector<1x1xf32>
    %13 = vector.multi_reduction <add>, %12, %cst_21 [2] : vector<1x1x32xf32> to vector<1x1xf32>
    %14 = vector.shape_cast %13 : vector<1x1xf32> to vector<1x1x1xf32>
    "tpu.trace_start"() <{level = 10 : i32, message = "bcv,bnv->bcn"}> : () -> ()
    %cst_22 = arith.constant dense<0.000000e+00> : vector<1x8x16xf32>
    %15 = tpu.matmul %0, %4, %cst_22 {dimension_numbers = #tpu.dot_dimension_numbers<[2], [2], [1], [1], [0, 0, 0, 1, 1, 1], [0], [0]>} : vector<1x8x32xf32>, vector<1x16x32xf32>, vector<1x8x16xf32> -> vector<1x8x16xf32>
    "tpu.trace_stop"() : () -> ()
    %16 = vector.broadcast %5 : vector<1x8x1xf32> to vector<1x8x16xf32>
    %17 = arith.addf %15, %16 : vector<1x8x16xf32>
    %18 = vector.broadcast %11 : vector<1x8x1xf32> to vector<1x8x16xf32>
    %19 = arith.mulf %17, %18 : vector<1x8x16xf32>
    "tpu.trace_start"() <{level = 10 : i32, message = "bcv,bnv->bcn"}> : () -> ()
    %cst_23 = arith.constant dense<0.000000e+00> : vector<1x4x16xf32>
    %20 = tpu.matmul %1, %4, %cst_23 {dimension_numbers = #tpu.dot_dimension_numbers<[2], [2], [1], [1], [0, 0, 0, 1, 1, 1], [0], [0]>, precision = #tpu.contract_precision<fp32>} : vector<1x4x32xf32>, vector<1x16x32xf32>, vector<1x4x16xf32> -> vector<1x4x16xf32>
    "tpu.trace_stop"() : () -> ()
    %21 = vector.broadcast %6 : vector<1x4x1xf32> to vector<1x4x16xf32>
    %22 = arith.addf %20, %21 : vector<1x4x16xf32>
    "tpu.trace_start"() <{level = 10 : i32, message = "bcv,bnv->bcn"}> : () -> ()
    %cst_24 = arith.constant dense<0.000000e+00> : vector<1x1x16xf32>
    %23 = tpu.matmul %2, %4, %cst_24 {dimension_numbers = #tpu.dot_dimension_numbers<[2], [2], [1], [1], [0, 0, 0, 1, 1, 1], [0], [0]>, precision = #tpu.contract_precision<fp32>} : vector<1x1x32xf32>, vector<1x16x32xf32>, vector<1x1x16xf32> -> vector<1x1x16xf32>
    "tpu.trace_stop"() : () -> ()
    %24 = vector.broadcast %7 : vector<1x1x1xf32> to vector<1x1x16xf32>
    %25 = arith.subf %24, %23 : vector<1x1x16xf32>
    %cst_25 = arith.constant dense<0x7F800000> : vector<1x16xf32>
    %26 = vector.multi_reduction <minimumf>, %22, %cst_25 [1] : vector<1x4x16xf32> to vector<1x16xf32>
    %27 = vector.shape_cast %26 : vector<1x16xf32> to vector<1x1x16xf32>
    %28 = arith.minimumf %27, %25 : vector<1x1x16xf32>
    %cst_26 = arith.constant 0.000000e+00 : f32
    %29 = vector.broadcast %cst_26 : f32 to vector<1x1x16xf32>
    %30 = arith.cmpf oge, %28, %29 : vector<1x1x16xf32>
    %cst_27 = arith.constant 1.000000e+00 : f32
    %cst_28 = arith.constant 0.000000e+00 : f32
    %31 = vector.broadcast %cst_27 : f32 to vector<1x1x16xf32>
    %32 = vector.broadcast %cst_28 : f32 to vector<1x1x16xf32>
    %33 = arith.select %30, %31, %32 : vector<1x1x16xi1>, vector<1x1x16xf32>
    %34 = vector.broadcast %3 : vector<1x1x32xf32> to vector<1x16x32xf32>
    %35 = arith.cmpf one, %4, %34 : vector<1x16x32xf32>
    %cst_29 = arith.constant 1.000000e+00 : f32
    %cst_30 = arith.constant 0.000000e+00 : f32
    %36 = vector.broadcast %cst_29 : f32 to vector<1x16x32xf32>
    %37 = vector.broadcast %cst_30 : f32 to vector<1x16x32xf32>
    %38 = arith.select %35, %36, %37 : vector<1x16x32xi1>, vector<1x16x32xf32>
    %cst_31 = arith.constant 1.000000e+00 : f32
    %39 = vector.broadcast %cst_31 : f32 to vector<1x1x32xf32>
    "tpu.trace_start"() <{level = 10 : i32, message = "bov,bnv->bon"}> : () -> ()
    %cst_32 = arith.constant dense<0.000000e+00> : vector<1x1x16xf32>
    %40 = tpu.matmul %39, %38, %cst_32 {dimension_numbers = #tpu.dot_dimension_numbers<[2], [2], [1], [1], [0, 0, 0, 1, 1, 1], [0], [0]>} : vector<1x1x32xf32>, vector<1x16x32xf32>, vector<1x1x16xf32> -> vector<1x1x16xf32>
    %cst_33 = arith.constant 5.000000e-01 : f32
    "tpu.trace_stop"() : () -> ()
    %41 = vector.broadcast %cst_33 : f32 to vector<1x1x16xf32>
    %42 = arith.cmpf ogt, %40, %41 : vector<1x1x16xf32>
    %cst_34 = arith.constant 1.000000e+00 : f32
    %cst_35 = arith.constant 0.000000e+00 : f32
    %43 = vector.broadcast %cst_34 : f32 to vector<1x1x16xf32>
    %44 = vector.broadcast %cst_35 : f32 to vector<1x1x16xf32>
    %45 = arith.select %42, %43, %44 : vector<1x1x16xi1>, vector<1x1x16xf32>
    %46 = arith.mulf %45, %33 : vector<1x1x16xf32>
    %cst_36 = arith.constant 1.000000e-01 : f32
    %47 = vector.broadcast %cst_36 : f32 to vector<1x8x16xf32>
    %48 = arith.addf %47, %19 : vector<1x8x16xf32>
    %cst_37 = arith.constant 0.000000e+00 : f32
    %49 = vector.broadcast %cst_37 : f32 to vector<1x8x16xf32>
    %50 = arith.maximumf %48, %49 : vector<1x8x16xf32>
    %cst_38 = arith.constant -1.000000e+00 : f32
    %51 = vector.broadcast %cst_38 : f32 to vector<1x8x16xf32>
    %52 = arith.mulf %19, %51 : vector<1x8x16xf32>
    %cst_39 = arith.constant dense<0xFF800000> : vector<1x16xf32>
    %53 = vector.multi_reduction <maximumf>, %52, %cst_39 [1] : vector<1x8x16xf32> to vector<1x16xf32>
    %54 = vector.shape_cast %53 : vector<1x16xf32> to vector<1x1x16xf32>
    %55 = vector.broadcast %54 : vector<1x1x16xf32> to vector<1x8x16xf32>
    %56 = arith.subf %52, %55 : vector<1x8x16xf32>
    %57 = math.exp %56 : vector<1x8x16xf32>
    %58 = arith.mulf %57, %50 : vector<1x8x16xf32>
    %cst_40 = arith.constant dense<0.000000e+00> : vector<1x16xf32>
    %59 = vector.multi_reduction <add>, %58, %cst_40 [1] : vector<1x8x16xf32> to vector<1x16xf32>
    %60 = vector.shape_cast %59 : vector<1x16xf32> to vector<1x1x16xf32>
    %cst_41 = arith.constant dense<0.000000e+00> : vector<1x16xf32>
    %61 = vector.multi_reduction <add>, %57, %cst_41 [1] : vector<1x8x16xf32> to vector<1x16xf32>
    %62 = vector.shape_cast %61 : vector<1x16xf32> to vector<1x1x16xf32>
    %63 = tpu.reciprocal %62 {approx = true} : vector<1x1x16xf32> -> vector<1x1x16xf32>
    %64 = arith.mulf %60, %63 : vector<1x1x16xf32>
    %65 = arith.mulf %46, %64 : vector<1x1x16xf32>
    %cst_42 = arith.constant dense<0.000000e+00> : vector<1x1xf32>
    %66 = vector.multi_reduction <add>, %65, %cst_42 [2] : vector<1x1x16xf32> to vector<1x1xf32>
    %67 = vector.shape_cast %66 : vector<1x1xf32> to vector<1x1x1xf32>
    %cst_43 = arith.constant dense<0.000000e+00> : vector<1x1xf32>
    %68 = vector.multi_reduction <add>, %46, %cst_43 [2] : vector<1x1x16xf32> to vector<1x1xf32>
    %69 = vector.shape_cast %68 : vector<1x1xf32> to vector<1x1x1xf32>
    %c0_i32 = arith.constant 0 : i32
    %70 = arith.cmpi eq, %arg1, %c0_i32 : i32
    %71 = arith.extui %70 : i1 to i32
    %c0_i32_44 = arith.constant 0 : i32
    %72 = arith.cmpi ne, %71, %c0_i32_44 : i32
    scf.if %72 {
      %cst_59 = arith.constant 0.000000e+00 : f32
      %82 = vector.broadcast %cst_59 : f32 to vector<1x1x1xf32>
      %c0_60 = arith.constant 0 : index
      %c0_61 = arith.constant 0 : index
      %c0_62 = arith.constant 0 : index
      %83 = vector.load %arg9[%c0_60, %c0_61, %c0_62] : memref<1x1x1xf32, #tpu.memory_space<vmem>>, vector<1x1x1xf32>
      tpu.vector_store %arg9[%c0_60, %c0_61, %c0_62], %82 {strides = array<i32>} : memref<1x1x1xf32, #tpu.memory_space<vmem>>, vector<1x1x1xf32>,
      %cst_63 = arith.constant 0.000000e+00 : f32
      %84 = vector.broadcast %cst_63 : f32 to vector<1x1x1xf32>
      %c0_64 = arith.constant 0 : index
      %c0_65 = arith.constant 0 : index
      %c0_66 = arith.constant 0 : index
      %85 = vector.load %arg10[%c0_64, %c0_65, %c0_66] : memref<1x1x1xf32, #tpu.memory_space<vmem>>, vector<1x1x1xf32>
      tpu.vector_store %arg10[%c0_64, %c0_65, %c0_66], %84 {strides = array<i32>} : memref<1x1x1xf32, #tpu.memory_space<vmem>>, vector<1x1x1xf32>,
    } else {
    }
    %c0_45 = arith.constant 0 : index
    %c0_46 = arith.constant 0 : index
    %c0_47 = arith.constant 0 : index
    %73 = vector.load %arg9[%c0_45, %c0_46, %c0_47] : memref<1x1x1xf32, #tpu.memory_space<vmem>>, vector<1x1x1xf32>
    %74 = arith.addf %73, %67 : vector<1x1x1xf32>
    %c0_48 = arith.constant 0 : index
    %c0_49 = arith.constant 0 : index
    %c0_50 = arith.constant 0 : index
    %75 = vector.load %arg9[%c0_48, %c0_49, %c0_50] : memref<1x1x1xf32, #tpu.memory_space<vmem>>, vector<1x1x1xf32>
    tpu.vector_store %arg9[%c0_48, %c0_49, %c0_50], %74 {strides = array<i32>} : memref<1x1x1xf32, #tpu.memory_space<vmem>>, vector<1x1x1xf32>,
    %c0_51 = arith.constant 0 : index
    %c0_52 = arith.constant 0 : index
    %c0_53 = arith.constant 0 : index
    %76 = vector.load %arg10[%c0_51, %c0_52, %c0_53] : memref<1x1x1xf32, #tpu.memory_space<vmem>>, vector<1x1x1xf32>
    %77 = arith.addf %76, %69 : vector<1x1x1xf32>
    %c0_54 = arith.constant 0 : index
    %c0_55 = arith.constant 0 : index
    %c0_56 = arith.constant 0 : index
    %78 = vector.load %arg10[%c0_54, %c0_55, %c0_56] : memref<1x1x1xf32, #tpu.memory_space<vmem>>, vector<1x1x1xf32>
    tpu.vector_store %arg10[%c0_54, %c0_55, %c0_56], %77 {strides = array<i32>} : memref<1x1x1xf32, #tpu.memory_space<vmem>>, vector<1x1x1xf32>,
    %c0_i32_57 = arith.constant 0 : i32
    %79 = arith.cmpi eq, %arg1, %c0_i32_57 : i32
    %80 = arith.extui %79 : i1 to i32
    %c0_i32_58 = arith.constant 0 : i32
    %81 = arith.cmpi ne, %80, %c0_i32_58 : i32
    scf.if %81 {
      %c0_59 = arith.constant 0 : index
      %c0_60 = arith.constant 0 : index
      %c0_61 = arith.constant 0 : index
      %82 = vector.load %arg9[%c0_59, %c0_60, %c0_61] : memref<1x1x1xf32, #tpu.memory_space<vmem>>, vector<1x1x1xf32>
      %c0_62 = arith.constant 0 : index
      %c0_63 = arith.constant 0 : index
      %c0_64 = arith.constant 0 : index
      %83 = vector.load %arg10[%c0_62, %c0_63, %c0_64] : memref<1x1x1xf32, #tpu.memory_space<vmem>>, vector<1x1x1xf32>
      %cst_65 = arith.constant 1.1920929E-7 : f32
      %84 = vector.broadcast %cst_65 : f32 to vector<1x1x1xf32>
      %85 = arith.addf %83, %84 : vector<1x1x1xf32>
      %86 = tpu.reciprocal %85 {approx = true} : vector<1x1x1xf32> -> vector<1x1x1xf32>
      %87 = arith.mulf %82, %86 : vector<1x1x1xf32>
      %88 = vector.broadcast %3 : vector<1x1x32xf32> to vector<1x8x32xf32>
      %89 = arith.mulf %0, %88 : vector<1x8x32xf32>
      %cst_66 = arith.constant dense<0.000000e+00> : vector<1x8xf32>
      %90 = vector.multi_reduction <add>, %89, %cst_66 [2] : vector<1x8x32xf32> to vector<1x8xf32>
      %91 = vector.shape_cast %90 : vector<1x8xf32> to vector<1x8x1xf32>
      %92 = arith.addf %91, %5 : vector<1x8x1xf32>
      %93 = arith.mulf %92, %11 : vector<1x8x1xf32>
      %cst_67 = arith.constant 1.000000e-01 : f32
      %94 = vector.broadcast %cst_67 : f32 to vector<1x8x1xf32>
      %95 = arith.subf %94, %93 : vector<1x8x1xf32>
      %cst_68 = arith.constant 0.000000e+00 : f32
      %96 = vector.broadcast %cst_68 : f32 to vector<1x8x1xf32>
      %97 = arith.maximumf %95, %96 : vector<1x8x1xf32>
      %cst_69 = arith.constant dense<0.000000e+00> : vector<1x1xf32>
      %98 = vector.multi_reduction <add>, %97, %cst_69 [1] : vector<1x8x1xf32> to vector<1x1xf32>
      %99 = vector.shape_cast %98 : vector<1x1xf32> to vector<1x1x1xf32>
      %cst_70 = arith.constant 1.250000e-01 : f32
      %100 = vector.broadcast %cst_70 : f32 to vector<1x1x1xf32>
      %101 = arith.mulf %99, %100 : vector<1x1x1xf32>
      %102 = arith.mulf %1, %1 : vector<1x4x32xf32>
      %cst_71 = arith.constant dense<0.000000e+00> : vector<1x4xf32>
      %103 = vector.multi_reduction <add>, %102, %cst_71 [2] : vector<1x4x32xf32> to vector<1x4xf32>
      %104 = vector.shape_cast %103 : vector<1x4xf32> to vector<1x4x1xf32>
      %cst_72 = arith.constant 1.000000e-24 : f32
      %105 = vector.broadcast %cst_72 : f32 to vector<1x4x1xf32>
      %106 = arith.maximumf %104, %105 : vector<1x4x1xf32>
      %107 = math.rsqrt %106 : vector<1x4x1xf32>
      %cst_73 = arith.constant 1.000000e-24 : f32
      %108 = vector.broadcast %cst_73 : f32 to vector<1x1x1xf32>
      %109 = arith.maximumf %14, %108 : vector<1x1x1xf32>
      %110 = math.rsqrt %109 : vector<1x1x1xf32>
      %111 = vector.broadcast %11 : vector<1x8x1xf32> to vector<1x8x32xf32>
      %112 = arith.mulf %0, %111 : vector<1x8x32xf32>
      %cst_74 = arith.constant dense<0.000000e+00> : vector<1x32xf32>
      %113 = vector.multi_reduction <add>, %112, %cst_74 [1] : vector<1x8x32xf32> to vector<1x32xf32>
      %114 = vector.shape_cast %113 : vector<1x32xf32> to vector<1x1x32xf32>
      %115 = vector.broadcast %107 : vector<1x4x1xf32> to vector<1x4x32xf32>
      %116 = arith.mulf %1, %115 : vector<1x4x32xf32>
      %cst_75 = arith.constant dense<0.000000e+00> : vector<1x32xf32>
      %117 = vector.multi_reduction <add>, %116, %cst_75 [1] : vector<1x4x32xf32> to vector<1x32xf32>
      %118 = vector.shape_cast %117 : vector<1x32xf32> to vector<1x1x32xf32>
      %119 = arith.addf %114, %118 : vector<1x1x32xf32>
      %120 = vector.broadcast %110 : vector<1x1x1xf32> to vector<1x1x32xf32>
      %121 = arith.mulf %2, %120 : vector<1x1x32xf32>
      %122 = arith.subf %119, %121 : vector<1x1x32xf32>
      %cst_76 = arith.constant 0.0769230798 : f32
      %123 = vector.broadcast %cst_76 : f32 to vector<1x1x32xf32>
      %124 = arith.mulf %122, %123 : vector<1x1x32xf32>
      %125 = arith.mulf %124, %124 : vector<1x1x32xf32>
      %cst_77 = arith.constant dense<0.000000e+00> : vector<1x1xf32>
      %126 = vector.multi_reduction <add>, %125, %cst_77 [2] : vector<1x1x32xf32> to vector<1x1xf32>
      %127 = vector.shape_cast %126 : vector<1x1xf32> to vector<1x1x1xf32>
      %cst_78 = arith.constant 3.125000e-02 : f32
      %128 = vector.broadcast %cst_78 : f32 to vector<1x1x1xf32>
      %129 = arith.mulf %127, %128 : vector<1x1x1xf32>
      %130 = tpu.iota {dimensions = array<i32: 2>} : vector<1x1x128xi32>
      %c0_i32_79 = arith.constant 0 : i32
      %131 = vector.broadcast %c0_i32_79 : i32 to vector<1x1x128xi32>
      %132 = arith.cmpi eq, %130, %131 : vector<1x1x128xi32>
      %cst_80 = arith.constant 0.000000e+00 : f32
      %133 = vector.shape_cast %101 : vector<1x1x1xf32> to vector<1x1x1xf32>
      %134 = vector.broadcast %133 : vector<1x1x1xf32> to vector<1x1x128xf32>
      %135 = vector.broadcast %cst_80 : f32 to vector<1x1x128xf32>
      %136 = arith.select %132, %134, %135 : vector<1x1x128xi1>, vector<1x1x128xf32>
      %c1_i32 = arith.constant 1 : i32
      %137 = vector.broadcast %c1_i32 : i32 to vector<1x1x128xi32>
      %138 = arith.cmpi eq, %130, %137 : vector<1x1x128xi32>
      %cst_81 = arith.constant 0.000000e+00 : f32
      %139 = vector.shape_cast %87 : vector<1x1x1xf32> to vector<1x1x1xf32>
      %140 = vector.broadcast %139 : vector<1x1x1xf32> to vector<1x1x128xf32>
      %141 = vector.broadcast %cst_81 : f32 to vector<1x1x128xf32>
      %142 = arith.select %138, %140, %141 : vector<1x1x128xi1>, vector<1x1x128xf32>
      %143 = arith.addf %136, %142 : vector<1x1x128xf32>
      %c2_i32 = arith.constant 2 : i32
      %144 = vector.broadcast %c2_i32 : i32 to vector<1x1x128xi32>
      %145 = arith.cmpi eq, %130, %144 : vector<1x1x128xi32>
      %cst_82 = arith.constant 0.000000e+00 : f32
      %146 = vector.shape_cast %129 : vector<1x1x1xf32> to vector<1x1x1xf32>
      %147 = vector.broadcast %146 : vector<1x1x1xf32> to vector<1x1x128xf32>
      %148 = vector.broadcast %cst_82 : f32 to vector<1x1x128xf32>
      %149 = arith.select %145, %147, %148 : vector<1x1x128xi1>, vector<1x1x128xf32>
      %150 = arith.addf %143, %149 : vector<1x1x128xf32>
      %c0_83 = arith.constant 0 : index
      %c0_84 = arith.constant 0 : index
      %c0_85 = arith.constant 0 : index
      %151 = vector.load %arg8[%c0_83, %c0_84, %c0_85] : memref<1x1x128xf32, #tpu.memory_space<vmem>>, vector<1x1x128xf32>
      tpu.vector_store %arg8[%c0_83, %c0_84, %c0_85], %150 {strides = array<i32>} : memref<1x1x128xf32, #tpu.memory_space<vmem>>, vector<1x1x128xf32>,
    } else {
    }
    return
  }
  func.func @transform_0(%arg0: i32, %arg1: i32) -> (i32, i32, i32) {
    %c0_i32 = arith.constant 0 : i32
    %c0_i32_0 = arith.constant 0 : i32
    %c0_i32_1 = arith.constant 0 : i32
    return %arg0, %c0_i32, %c0_i32_0 : i32, i32, i32
  }
  func.func @transform_1(%arg0: i32, %arg1: i32) -> (i32, i32, i32) {
    %c0_i32 = arith.constant 0 : i32
    %c0_i32_0 = arith.constant 0 : i32
    %c0_i32_1 = arith.constant 0 : i32
    return %arg0, %c0_i32, %c0_i32_0 : i32, i32, i32
  }
  func.func @transform_2(%arg0: i32, %arg1: i32) -> (i32, i32, i32) {
    %c0_i32 = arith.constant 0 : i32
    %c0_i32_0 = arith.constant 0 : i32
    %c0_i32_1 = arith.constant 0 : i32
    return %arg0, %c0_i32, %c0_i32_0 : i32, i32, i32
  }
  func.func @transform_3(%arg0: i32, %arg1: i32) -> (i32, i32, i32) {
    %c0_i32 = arith.constant 0 : i32
    %c0_i32_0 = arith.constant 0 : i32
    %c0_i32_1 = arith.constant 0 : i32
    return %arg0, %c0_i32, %c0_i32_0 : i32, i32, i32
  }
  func.func @transform_4(%arg0: i32, %arg1: i32) -> (i32, i32, i32) {
    %c0_i32 = arith.constant 0 : i32
    %c0_i32_0 = arith.constant 0 : i32
    %c0_i32_1 = arith.constant 0 : i32
    return %arg0, %c0_i32, %c0_i32_0 : i32, i32, i32
  }
  func.func @transform_5(%arg0: i32, %arg1: i32) -> (i32, i32, i32) {
    %c0_i32 = arith.constant 0 : i32
    %c0_i32_0 = arith.constant 0 : i32
    return %arg0, %arg1, %c0_i32 : i32, i32, i32
  }
  func.func @transform_6(%arg0: i32, %arg1: i32) -> (i32, i32, i32) {
    %c0_i32 = arith.constant 0 : i32
    %c0_i32_0 = arith.constant 0 : i32
    %c0_i32_1 = arith.constant 0 : i32
    return %arg0, %c0_i32, %c0_i32_0 : i32, i32, i32
  }
}

</mosaic_0001>

<llo_original>
// kernel: tpu_custom_call.1
$region0: #{tpu_custom_call.1}
  #allocation0 [shape = 'u32[]', space=smem, size = 0x4, offset = 0x4, fixed_abs, tag = 'smem constant byte address 0x4 - core index']
  #allocation1 [shape = 'u32[72,128]{1,0:T(1,128)}', space=vmem, size = 0x9000, scoped, tag = 'internal scratch']
  #allocation2 [shape = 'f32[1,1,1]{2,1,0:T(1,128)}', space=vmem, size = 0x200, scoped, tag = 'scratch operand']
  #allocation3 [shape = 'f32[1,1,1]{2,1,0:T(1,128)}', space=vmem, size = 0x200, scoped, tag = 'scratch operand']
  %s0 = inlined_call_operand.hbm [shape: f32[2,8,32], index: 0, kind: input, shape index: {}]
  %s1 = inlined_call_operand.hbm [shape: f32[2,4,32], index: 1, kind: input, shape index: {}]
  %s2 = inlined_call_operand.vmem [shape: f32[2,1,32], index: 2, kind: input, shape index: {}]
  %s3 = inlined_call_operand.hbm [shape: f32[2,1,32], index: 3, kind: input, shape index: {}]
  %s4 = inlined_call_operand.vmem [shape: f32[2,13,1], index: 4, kind: input, shape index: {}]
  %s5 = inlined_call_operand.vmem [shape: f32[2,16,32], index: 5, kind: input, shape index: {}]
  %s6 = inlined_call_operand.hbm [shape: f32[2,1,128], index: 6, kind: output, shape index: {}]
  %s7 = sld [smem:[#allocation0]]
  $region77: #{tpu_custom_call.1} parent=0
    _
  %s9 = ssub.s32 1, %s7
  %s10 = scalar_select 0, %s9, %s7
  $region1: #{tpu_custom_call.1} parent=0
    #allocation4 [shape = 'u8[8192]{0}', space=vmem, size = 0x2000, scoped, tag = 'input window, operand 0']
    #allocation5 [shape = 's32[2]{0}', space=sflag, size = 0x8, scoped, tag = 'scoped memory for tpu_custom_call.1']
    #allocation6 [shape = 's32[2]{0}', space=sflag, size = 0x8, scoped, tag = 'scoped memory for tpu_custom_call.1']
    #allocation7 [shape = 'u8[4096]{0}', space=vmem, size = 0x1000, scoped, tag = 'input window, operand 1']
    #allocation8 [shape = 's32[2]{0}', space=sflag, size = 0x8, scoped, tag = 'scoped memory for tpu_custom_call.1']
    #allocation9 [shape = 'u8[1024]{0}', space=vmem, size = 0x400, scoped, tag = 'input window, operand 3']
    #allocation10 [shape = 'u8[1024]{0}', space=vmem, size = 0x400, scoped, tag = 'output window, operand 0']
    %11 = vsyncpa [#allocation5], 0
    %s12 = scalar_lea.sflag [#allocation5], 1
    %13 = vsyncpa %s12, 0
    %14 = vsyncpa [#allocation8], 0
    %s15 = scalar_lea.sflag [#allocation8], 1
    %16 = vsyncpa %s15, 0
    %17 = vsyncpa [#allocation6], 0
    %s18 = scalar_lea.sflag [#allocation6], 1
    %19 = vsyncpa %s18, 0
    loop: start=0, step=1, limit=4
    $region2: #{tpu_custom_call.1} parent=1 // loop_pre_header
      _
    $region3: #{tpu_custom_call.1} parent=1 // loop_header
      %s21 = sphi 0, %s25
      %p22 = scmp.ge.s32.totalorder %s21, 4
      %s28 = sphi 0, %s40
      %s29 = sphi 0, %s36
      %s30 = sphi 0, %s28
      %s31 = sphi 0, %s29
      %s32 = sphi 0, %s30
      %s33 = sphi 0, %s31
      %s43 = sphi 0, %s45
      %s46 = sphi 0, %s43
      %s47 = sphi 0, %s46
      %s63 = sphi 0, %s47
      %s69 = sphi 0, %s71
      %s72 = sphi 0, %s69
      %s73 = sphi 0, %s72
      %s89 = sphi 0, %s73
      %s95 = sphi 0, %s97
      %s98 = sphi 0, %s95
      %s99 = sphi 0, %s98
      %s115 = sphi 0, %s99
      %s121 = sphi 0, %s123
      %s124 = sphi 0, %s121
      %s125 = sphi 0, %s124
      %s141 = sphi 0, %s125
      %s147 = sphi 0, %s149
      %s150 = sphi 0, %s147
      %s151 = sphi 0, %s150
      %s167 = sphi 0, %s151
      %s175 = sphi 0, %s177
      %s178 = sphi 0, %s175
      %s179 = sphi 0, %s178
      %s195 = sphi 0, %s179
      %s201 = sphi 0, %s203
      %s204 = sphi 0, %s201
      %s205 = sphi 0, %s204
      %s221 = sphi 0, %s205
    $region4: #{tpu_custom_call.1} parent=1 // loop_header_branch
      %24 = sbr.rel (%p22) target = $region8
    $region5: #{tpu_custom_call.1} parent=1 // loop_body
      %s26 = ssub.s32 %s21, 1
      %s27 = ssub.s32 %s21, 2
      %s34 = sadd.s32 1, %s29
      %p35 = scmp.ge.s32.totalorder %s34, 1
      %s36 = scalar_select %p35, 0, %s34
      %s37 = sadd.s32 1, %s28
      %s38 = scalar_select %p35, %s37, %s28
      %p39 = scmp.ge.s32.totalorder %s38, 2
      %s40 = scalar_select %p39, 0, %s38
      %s41 = ssub.s32 %s28, %s40
      %p42 = scmp.eq.s32.totalorder %s41, 0
      %s44 = sadd.s32 %s43, 1
      %s45 = scalar_select %p42, %s43, %s44
      %p48 = pneg %p42
      %p49 = scmp.eq.s32.totalorder %s21, 1
      %p50 = por %p48, %p49
      %p51 = scmp.ne.s32.totalorder %s43, %s46
      %p52 = scmp.eq.s32.totalorder %s21, 0
      %p53 = por %p51, %p52
      %p54 = scmp.ne.s32.totalorder %s43, %s46
      %p55 = scmp.eq.s32.totalorder %s26, 1
      %p56 = por %p54, %p55
      %p57 = scmp.ne.s32.totalorder %s46, %s47
      %p58 = scmp.eq.s32.totalorder %s26, 0
      %p59 = por %p57, %p58
      %p60 = scmp.ne.s32.totalorder %s46, %s47
      %p61 = scmp.eq.s32.totalorder %s27, 1
      %p62 = por %p60, %p61
      %p64 = scmp.ne.s32.totalorder %s47, %s63
      %p65 = scmp.eq.s32.totalorder %s27, 0
      %p66 = por %p64, %p65
      %s67 = ssub.s32 %s28, %s40
      %p68 = scmp.eq.s32.totalorder %s67, 0
      %s70 = sadd.s32 %s69, 1
      %s71 = scalar_select %p68, %s69, %s70
      %p74 = pneg %p68
      %p75 = scmp.eq.s32.totalorder %s21, 1
      %p76 = por %p74, %p75
      %p77 = scmp.ne.s32.totalorder %s69, %s72
      %p78 = scmp.eq.s32.totalorder %s21, 0
      %p79 = por %p77, %p78
      %p80 = scmp.ne.s32.totalorder %s69, %s72
      %p81 = scmp.eq.s32.totalorder %s26, 1
      %p82 = por %p80, %p81
      %p83 = scmp.ne.s32.totalorder %s72, %s73
      %p84 = scmp.eq.s32.totalorder %s26, 0
      %p85 = por %p83, %p84
      %p86 = scmp.ne.s32.totalorder %s72, %s73
      %p87 = scmp.eq.s32.totalorder %s27, 1
      %p88 = por %p86, %p87
      %p90 = scmp.ne.s32.totalorder %s73, %s89
      %p91 = scmp.eq.s32.totalorder %s27, 0
      %p92 = por %p90, %p91
      %s93 = ssub.s32 %s28, %s40
      %p94 = scmp.eq.s32.totalorder %s93, 0
      %s96 = sadd.s32 %s95, 1
      %s97 = scalar_select %p94, %s95, %s96
      %p100 = pneg %p94
      %p101 = scmp.eq.s32.totalorder %s21, 1
      %p102 = por %p100, %p101
      %p103 = scmp.ne.s32.totalorder %s95, %s98
      %p104 = scmp.eq.s32.totalorder %s21, 0
      %p105 = por %p103, %p104
      %p106 = scmp.ne.s32.totalorder %s95, %s98
      %p107 = scmp.eq.s32.totalorder %s26, 1
      %p108 = por %p106, %p107
      %p109 = scmp.ne.s32.totalorder %s98, %s99
      %p110 = scmp.eq.s32.totalorder %s26, 0
      %p111 = por %p109, %p110
      %p112 = scmp.ne.s32.totalorder %s98, %s99
      %p113 = scmp.eq.s32.totalorder %s27, 1
      %p114 = por %p112, %p113
      %p116 = scmp.ne.s32.totalorder %s99, %s115
      %p117 = scmp.eq.s32.totalorder %s27, 0
      %p118 = por %p116, %p117
      %s119 = ssub.s32 %s28, %s40
      %p120 = scmp.eq.s32.totalorder %s119, 0
      %s122 = sadd.s32 %s121, 1
      %s123 = scalar_select %p120, %s121, %s122
      %p126 = pneg %p120
      %p127 = scmp.eq.s32.totalorder %s21, 1
      %p128 = por %p126, %p127
      %p129 = scmp.ne.s32.totalorder %s121, %s124
      %p130 = scmp.eq.s32.totalorder %s21, 0
      %p131 = por %p129, %p130
      %p132 = scmp.ne.s32.totalorder %s121, %s124
      %p133 = scmp.eq.s32.totalorder %s26, 1
      %p134 = por %p132, %p133
      %p135 = scmp.ne.s32.totalorder %s124, %s125
      %p136 = scmp.eq.s32.totalorder %s26, 0
      %p137 = por %p135, %p136
      %p138 = scmp.ne.s32.totalorder %s124, %s125
      %p139 = scmp.eq.s32.totalorder %s27, 1
      %p140 = por %p138, %p139
      %p142 = scmp.ne.s32.totalorder %s125, %s141
      %p143 = scmp.eq.s32.totalorder %s27, 0
      %p144 = por %p142, %p143
      %s145 = ssub.s32 %s28, %s40
      %p146 = scmp.eq.s32.totalorder %s145, 0
      %s148 = sadd.s32 %s147, 1
      %s149 = scalar_select %p146, %s147, %s148
      %p152 = pneg %p146
      %p153 = scmp.eq.s32.totalorder %s21, 1
      %p154 = por %p152, %p153
      %p155 = scmp.ne.s32.totalorder %s147, %s150
      %p156 = scmp.eq.s32.totalorder %s21, 0
      %p157 = por %p155, %p156
      %p158 = scmp.ne.s32.totalorder %s147, %s150
      %p159 = scmp.eq.s32.totalorder %s26, 1
      %p160 = por %p158, %p159
      %p161 = scmp.ne.s32.totalorder %s150, %s151
      %p162 = scmp.eq.s32.totalorder %s26, 0
      %p163 = por %p161, %p162
      %p164 = scmp.ne.s32.totalorder %s150, %s151
      %p165 = scmp.eq.s32.totalorder %s27, 1
      %p166 = por %p164, %p165
      %p168 = scmp.ne.s32.totalorder %s151, %s167
      %p169 = scmp.eq.s32.totalorder %s27, 0
      %p170 = por %p168, %p169
      %s171 = ssub.s32 %s28, %s40
      %s172 = ssub.s32 %s29, %s36
      %s173 = sor.u32 %s171, %s172
      %p174 = scmp.eq.s32.totalorder %s173, 0
      %s176 = sadd.s32 %s175, 1
      %s177 = scalar_select %p174, %s175, %s176
      %p180 = pneg %p174
      %p181 = scmp.eq.s32.totalorder %s21, 1
      %p182 = por %p180, %p181
      %p183 = scmp.ne.s32.totalorder %s175, %s178
      %p184 = scmp.eq.s32.totalorder %s21, 0
      %p185 = por %p183, %p184
      %p186 = scmp.ne.s32.totalorder %s175, %s178
      %p187 = scmp.eq.s32.totalorder %s26, 1
      %p188 = por %p186, %p187
      %p189 = scmp.ne.s32.totalorder %s178, %s179
      %p190 = scmp.eq.s32.totalorder %s26, 0
      %p191 = por %p189, %p190
      %p192 = scmp.ne.s32.totalorder %s178, %s179
      %p193 = scmp.eq.s32.totalorder %s27, 1
      %p194 = por %p192, %p193
      %p196 = scmp.ne.s32.totalorder %s179, %s195
      %p197 = scmp.eq.s32.totalorder %s27, 0
      %p198 = por %p196, %p197
      %s199 = ssub.s32 %s28, %s40
      %p200 = scmp.eq.s32.totalorder %s199, 0
      %s202 = sadd.s32 %s201, 1
      %s203 = scalar_select %p200, %s201, %s202
      %p206 = pneg %p200
      %p207 = scmp.eq.s32.totalorder %s21, 1
      %p208 = por %p206, %p207
      %p209 = scmp.ne.s32.totalorder %s201, %s204
      %p210 = scmp.eq.s32.totalorder %s21, 0
      %p211 = por %p209, %p210
      %p212 = scmp.ne.s32.totalorder %s201, %s204
      %p213 = scmp.eq.s32.totalorder %s26, 1
      %p214 = por %p212, %p213
      %p215 = scmp.ne.s32.totalorder %s204, %s205
      %p216 = scmp.eq.s32.totalorder %s26, 0
      %p217 = por %p215, %p216
      %p218 = scmp.ne.s32.totalorder %s204, %s205
      %p219 = scmp.eq.s32.totalorder %s27, 1
      %p220 = por %p218, %p219
      %p222 = scmp.ne.s32.totalorder %s205, %s221
      %p223 = scmp.eq.s32.totalorder %s27, 0
      %p224 = por %p222, %p223
      %p225 = scmp.le.s32.totalorder 1, %s21
      %p226 = scmp.lt.s32.totalorder %s21, 3
      %p227 = pnand %p225, %p226
      %p228 = pneg %p227
      // Predicated region
      $region9: #{tpu_custom_call.1} parent=5 // pred_check
        _
      $region10: #{tpu_custom_call.1} parent=5 // pred_check_branch
        %230 = sbr.rel (%p227) target = $region12
      $region11: #{tpu_custom_call.1} parent=5 // pred_region
        %s231 = ssub.s32 %s21, 1
      $region12: #{tpu_custom_call.1} parent=5 // pred_fallthru
        _
      %p232 = scmp.lt.s32.totalorder %s21, 2
      // Predicated region
      $region13: #{tpu_custom_call.1} parent=5 // pred_check
        %p233 = pneg %p232
      $region14: #{tpu_custom_call.1} parent=5 // pred_check_branch
        %235 = sbr.rel (%p233) target = $region16
      $region15: #{tpu_custom_call.1} parent=5 // pred_region
        // Predicated region
        $region17: #{tpu_custom_call.1} parent=15 // pred_check
          %p236 = pneg %p53
        $region18: #{tpu_custom_call.1} parent=15 // pred_check_branch
          %238 = sbr.rel (%p236) target = $region20
        $region19: #{tpu_custom_call.1} parent=15 // pred_region
          %s239 = sand.u32 %s43, 1
          %s240 = scalar_lea.sflag [#allocation5], %s239
          %s241 = sand.u32 %s43, 1
          %s242 = smul.addr %s241, 8
          %s243 = scalar_lea.vmem [#allocation4], %s242
          %245 = vsyncadd %s240, 0
          %s246 = smul.addr %s28, 8
          %s247 = scalar_lea.hbm %s0, %s246
          %s249 = sshll.u32 %s247, 4
          %s250 = int_to_ptr.hbm [resolvable:$true] %s249
          %s251 = sshll.u32 %s243, 4
          %s252 = int_to_ptr.vmem [resolvable:$true] %s251
          %254 = dma.hbm_to_vmem [thread:$0]  %s250, 128, %s252, %s240
        $region20: #{tpu_custom_call.1} parent=15 // pred_fallthru
          _
        // Predicated region
        $region21: #{tpu_custom_call.1} parent=15 // pred_check
          %p255 = pneg %p79
        $region22: #{tpu_custom_call.1} parent=15 // pred_check_branch
          %257 = sbr.rel (%p255) target = $region24
        $region23: #{tpu_custom_call.1} parent=15 // pred_region
          %s258 = sand.u32 %s21, 1
          %s259 = scalar_lea.sflag [#allocation8], %s258
          %s260 = sand.u32 %s69, 1
          %s261 = smul.addr %s260, 4
          %s262 = scalar_lea.vmem [#allocation7], %s261
          %264 = vsyncadd %s259, 0
          %s265 = smul.addr %s28, 4
          %s266 = scalar_lea.hbm %s1, %s265
          %s268 = sshll.u32 %s266, 4
          %s269 = int_to_ptr.hbm [resolvable:$true] %s268
          %s270 = sshll.u32 %s262, 4
          %s271 = int_to_ptr.vmem [resolvable:$true] %s270
          %273 = dma.hbm_to_vmem [thread:$0]  %s269, 64, %s271, %s259
        $region24: #{tpu_custom_call.1} parent=15 // pred_fallthru
          _
        // Predicated region
        $region25: #{tpu_custom_call.1} parent=15 // pred_check
          %p274 = pneg %p105
        $region26: #{tpu_custom_call.1} parent=15 // pred_check_branch
          %276 = sbr.rel (%p274) target = $region28
        $region27: #{tpu_custom_call.1} parent=15 // pred_region
          %p277 = scmp.lt.s32.totalorder %s28, 1
          %s278 = scalar_select %p277, %s28, 1
          %s279 = scalar_lea.vmem %s2, %s278
        $region28: #{tpu_custom_call.1} parent=15 // pred_fallthru
          _
        // Predicated region
        $region29: #{tpu_custom_call.1} parent=15 // pred_check
          %p280 = pneg %p131
        $region30: #{tpu_custom_call.1} parent=15 // pred_check_branch
          %282 = sbr.rel (%p280) target = $region32
        $region31: #{tpu_custom_call.1} parent=15 // pred_region
          %s283 = sand.u32 %s21, 1
          %s284 = scalar_lea.sflag [#allocation8], %s283
          %s285 = sand.u32 %s121, 1
          %s286 = scalar_lea.vmem [#allocation9], %s285
          %288 = vsyncadd %s284, 0
          %s289 = scalar_lea.hbm %s3, %s28
          %s291 = sshll.u32 %s289, 4
          %s292 = int_to_ptr.hbm [resolvable:$true] %s291
          %s293 = sshll.u32 %s286, 4
          %s294 = int_to_ptr.vmem [resolvable:$true] %s293
          %296 = dma.hbm_to_vmem [thread:$0]  %s292, 16, %s294, %s284
        $region32: #{tpu_custom_call.1} parent=15 // pred_fallthru
          _
        // Predicated region
        $region33: #{tpu_custom_call.1} parent=15 // pred_check
          %p297 = pneg %p157
        $region34: #{tpu_custom_call.1} parent=15 // pred_check_branch
          %299 = sbr.rel (%p297) target = $region36
        $region35: #{tpu_custom_call.1} parent=15 // pred_region
          %p300 = scmp.lt.s32.totalorder %s28, 1
          %s301 = scalar_select %p300, %s28, 1
          %s302 = smul.addr %s301, 2
          %s303 = smul.addr %s302, 8
          %s304 = scalar_lea.vmem %s4, %s303
        $region36: #{tpu_custom_call.1} parent=15 // pred_fallthru
          _
        // Predicated region
        $region37: #{tpu_custom_call.1} parent=15 // pred_check
          %p305 = pneg %p185
        $region38: #{tpu_custom_call.1} parent=15 // pred_check_branch
          %307 = sbr.rel (%p305) target = $region40
        $region39: #{tpu_custom_call.1} parent=15 // pred_region
          %s308 = smul.u32 2, %s29
          %p309 = scmp.lt.s32.totalorder %s28, 1
          %s310 = scalar_select %p309, %s28, 1
          %p311 = scmp.lt.s32.totalorder %s308, 1
          %s312 = scalar_select %p311, %s308, 1
          %s313 = smul.addr %s310, 2
          %s314 = sadd.s32 %s312, %s313
          %s315 = smul.addr %s314, 8
          %s316 = scalar_lea.vmem %s5, %s315
          %s317 = smul.u32 2, %s29
        $region40: #{tpu_custom_call.1} parent=15 // pred_fallthru
          _
      $region16: #{tpu_custom_call.1} parent=5 // pred_fallthru
        _
      %p318 = scmp.le.s32.totalorder 1, %s21
      %p319 = scmp.lt.s32.totalorder %s21, 3
      %p320 = pnand %p318, %p319
      %p321 = pneg %p320
      // Predicated region
      $region41: #{tpu_custom_call.1} parent=5 // pred_check
        _
      $region42: #{tpu_custom_call.1} parent=5 // pred_check_branch
        %323 = sbr.rel (%p320) target = $region44
      $region43: #{tpu_custom_call.1} parent=5 // pred_region
        %s324 = ssub.s32 %s21, 1
        %s325 = sand.u32 %s46, 1
        %s326 = scalar_lea.sflag [#allocation5], %s325
        %s327 = sand.u32 %s46, 1
        %s328 = smul.addr %s327, 8
        %s329 = scalar_lea.vmem [#allocation4], %s328
        // Predicated region
        $region45: #{tpu_custom_call.1} parent=43 // pred_check
          %p330 = pneg %p59
        $region46: #{tpu_custom_call.1} parent=43 // pred_check_branch
          %332 = sbr.rel (%p330) target = $region48
        $region47: #{tpu_custom_call.1} parent=43 // pred_region
          %334 = dma.done %s326, 128
        $region48: #{tpu_custom_call.1} parent=43 // pred_fallthru
          _
        %s335 = sand.u32 %s26, 1
        %s336 = scalar_lea.sflag [#allocation8], %s335
        %s337 = sand.u32 %s72, 1
        %s338 = smul.addr %s337, 4
        %s339 = scalar_lea.vmem [#allocation7], %s338
        // Predicated region
        $region49: #{tpu_custom_call.1} parent=43 // pred_check
          %p340 = pneg %p85
        $region50: #{tpu_custom_call.1} parent=43 // pred_check_branch
          %342 = sbr.rel (%p340) target = $region52
        $region51: #{tpu_custom_call.1} parent=43 // pred_region
          %344 = dma.done %s336, 64
        $region52: #{tpu_custom_call.1} parent=43 // pred_fallthru
          _
        %s345 = sand.u32 %s26, 1
        %s346 = scalar_lea.sflag [#allocation8], %s345
        %s347 = sand.u32 %s124, 1
        %s348 = scalar_lea.vmem [#allocation9], %s347
        // Predicated region
        $region53: #{tpu_custom_call.1} parent=43 // pred_check
          %p349 = pneg %p137
        $region54: #{tpu_custom_call.1} parent=43 // pred_check_branch
          %351 = sbr.rel (%p349) target = $region56
        $region55: #{tpu_custom_call.1} parent=43 // pred_region
          %353 = dma.done %s346, 16
        $region56: #{tpu_custom_call.1} parent=43 // pred_fallthru
          _
        %s354 = sand.u32 %s46, 1
        %s355 = scalar_lea.sflag [#allocation5], %s354
        %s356 = sand.u32 %s46, 1
        %s357 = smul.addr %s356, 8
        %s358 = scalar_lea.vmem [#allocation4], %s357
        %p359 = pneg %p59
        %p360 = pneg %p56
        %s361 = sand.u32 %s26, 1
        %s362 = scalar_lea.sflag [#allocation8], %s361
        %s363 = sand.u32 %s72, 1
        %s364 = smul.addr %s363, 4
        %s365 = scalar_lea.vmem [#allocation7], %s364
        %p366 = pneg %p85
        %p367 = pneg %p82
        %p368 = scmp.lt.s32.totalorder %s30, 1
        %s369 = scalar_select %p368, %s30, 1
        %s370 = scalar_lea.vmem %s2, %s369
        %p371 = pneg %p111
        %p372 = pneg %p108
        %s373 = sand.u32 %s26, 1
        %s374 = scalar_lea.sflag [#allocation8], %s373
        %s375 = sand.u32 %s124, 1
        %s376 = scalar_lea.vmem [#allocation9], %s375
        %p377 = pneg %p137
        %p378 = pneg %p134
        %p379 = scmp.lt.s32.totalorder %s30, 1
        %s380 = scalar_select %p379, %s30, 1
        %s381 = smul.addr %s380, 2
        %s382 = smul.addr %s381, 8
        %s383 = scalar_lea.vmem %s4, %s382
        %p384 = pneg %p163
        %p385 = pneg %p160
        %s386 = smul.u32 2, %s31
        %p387 = scmp.lt.s32.totalorder %s30, 1
        %s388 = scalar_select %p387, %s30, 1
        %p389 = scmp.lt.s32.totalorder %s386, 1
        %s390 = scalar_select %p389, %s386, 1
        %s391 = smul.addr %s388, 2
        %s392 = sadd.s32 %s390, %s391
        %s393 = smul.addr %s392, 8
        %s394 = scalar_lea.vmem %s5, %s393
        %p395 = pneg %p191
        %p396 = pneg %p188
        %p397 = pneg %p217
        %p398 = pneg %p214
        %s399 = sand.u32 %s204, 1
        %s400 = scalar_lea.sflag [#allocation6], %s399
        %s401 = sand.u32 %s204, 1
        %s402 = scalar_lea.vmem [#allocation10], %s401
        %p403 = scmp.lt.s32.totalorder %s30, 1
        %s404 = scalar_select %p403, %s30, 1
        %s405 = scalar_lea.vmem %s2, %s404
        %p406 = scmp.lt.s32.totalorder %s30, 1
        %s407 = scalar_select %p406, %s30, 1
        %s408 = smul.addr %s407, 2
        %s409 = smul.addr %s408, 8
        %s410 = scalar_lea.vmem %s4, %s409
        %s411 = smul.u32 2, %s31
        %p412 = scmp.lt.s32.totalorder %s30, 1
        %s413 = scalar_select %p412, %s30, 1
        %p414 = scmp.lt.s32.totalorder %s411, 1
        %s415 = scalar_select %p414, %s411, 1
        %s416 = smul.addr %s413, 2
        %s417 = sadd.s32 %s415, %s416
        %s418 = smul.addr %s417, 8
        %s419 = scalar_lea.vmem %s5, %s418
        %s420 = smul.u32 2, %s31
        %v421 = vld [vmem:[%s329] sm:$0xff]
        %v422 = vld [vmem:[%s339] sm:$0xf]
        %v423 = vld [vmem:[%s405] sm:$0x1]
        %v424 = vld [vmem:[%s348] sm:$0x1]
        %v425 = vld [vmem:[%s419] sm:$0xff]
        %v426 = vld [vmem:[%s419 + $0x8] sm:$0xff]
        %v427 = vld [vmem:[%s410] sm:$0xff]
        %v428 = vld [vmem:[%s410 + $0x8] sm:$0xf]
        %v429 = vld [vmem:[%s410 + $0xc] sm:$0x1]
        %v430 = vmul.f32 %v421, %v421
        %vm431 = vcmask 261120
        %v432 = vsel %vm431, %v430, 0.0
        %433 = vadd.xlane.f32.xlu0 %v432
        %v434 = vpop.xlane.xlu0 %433
        %v435 = vrsqrt.pop %v434
        %v436 = vmul.f32 %v435, %v434
        %v437 = vmul.f32 %v436, %v435
        %v438 = vmul.f32 0.5, %v437
        %v439 = vsub.f32 1.5, %v438
        %v440 = vmul.f32 %v435, %v439
        %vm441 = vweird.f32 %v434
        %vm442 = vweird.f32 %v435
        %vm443 = vmor %vm441, %vm442
        %v444 = vsel %vm443, %v435, %v440
        %v445 = vmul.f32 %v423, %v423
        %vm446 = vcmask 253952
        %v447 = vsel %vm446, %v445, 0.0
        %448 = vadd.xlane.f32.xlu0 %v447
        %v449 = vpop.xlane.xlu0 %448
        %451 = vset.pattern.permute.xlu0 0
        %452 = vperm.xlu0 %451, %v427
        %v453 = vpop.permute.xlu0 %452
        %v456 = vsel %vm431, %v421, 0
        %v459 = vsel %vm431, %v425, 0
        %v462 = vsel %vm431, %v426, 0
        %464 = vmatpush.xpose.msra.mxu0 0.0
        %465 = vmatpush.xpose.msra.mxu0 0.0
        %466 = vmatpush.xpose.msra.mxu0 0.0
        %467 = vmatpush.xpose.msra.mxu0 0.0
        %468 = vmatpush.xpose.msra.mxu0 0.0
        %469 = vmatpush.xpose.msra.mxu0 0.0
        %470 = vmatpush.xpose.msra.mxu0 0.0
        %471 = vmatpush.xpose.msra.mxu0 0.0
        %472 = vmatpush.xpose.msra.mxu0 0.0
        %473 = vmatpush.xpose.msra.mxu0 0.0
        %474 = vmatpush.xpose.msra.mxu0 0.0
        %475 = vmatpush.xpose.msra.mxu0 0.0
        %476 = vmatpush.xpose.msra.mxu0 0.0
        %477 = vmatpush.xpose.msra.mxu0 0.0
        %478 = vmatpush.xpose.msra.mxu0 %v462
        %479 = vmatpush.xpose.msra.mxu0 %v459
        %480 = vmatmul.f32.gmra.mxu0 %v456
        %v481 = vpop.f32.mrf.mxu0
        %v482 = vadd.f32 %v453, %v481
        %483 = vdwg.mxu0
        %v484 = vmul.f32 %v482, %v444
        %486 = vset.pattern.permute.xlu0 0
        %487 = vperm.xlu0 %486, %v428
        %v488 = vpop.permute.xlu0 %487
        %v491 = vsel %vm431, %v422, 0
        %493 = vmatpush.xpose.msra.mxu0 0.0
        %494 = vmatpush.xpose.msra.mxu0 0.0
        %495 = vmatpush.xpose.msra.mxu0 0.0
        %496 = vmatpush.xpose.msra.mxu0 0.0
        %497 = vmatpush.xpose.msra.mxu0 0.0
        %498 = vmatpush.xpose.msra.mxu0 0.0
        %499 = vmatpush.xpose.msra.mxu0 0.0
        %500 = vmatpush.xpose.msra.mxu0 0.0
        %501 = vmatpush.xpose.msra.mxu0 0.0
        %502 = vmatpush.xpose.msra.mxu0 0.0
        %503 = vmatpush.xpose.msra.mxu0 0.0
        %504 = vmatpush.xpose.msra.mxu0 0.0
        %505 = vmatpush.xpose.msra.mxu0 0.0
        %506 = vmatpush.xpose.msra.mxu0 0.0
        %v507 = vand.u32 %v462, 4294901760
        %508 = vmatpush.xpose.msra.mxu0 %v507
        %v509 = vand.u32 %v459, 4294901760
        %510 = vmatpush.xpose.msra.mxu0 %v509
        %v511 = vand.u32 %v491, 4294901760
        %v512 = vsub.f32 %v491, %v511
        %v513 = vand.u32 %v512, 4294901760
        %v514 = vsub.f32 %v512, %v513
        %v515 = vand.u32 %v514, 4294901760
        %516 = vmatmul.f32.gmra.mxu0 %v515
        %v517 = vpop.f32.mrf.mxu0
        %v518 = vadd.f32 %v488, %v517
        %519 = vdwg.mxu0
        %520 = vmatpush.xpose.msra.mxu0 0.0
        %521 = vmatpush.xpose.msra.mxu0 0.0
        %522 = vmatpush.xpose.msra.mxu0 0.0
        %523 = vmatpush.xpose.msra.mxu0 0.0
        %524 = vmatpush.xpose.msra.mxu0 0.0
        %525 = vmatpush.xpose.msra.mxu0 0.0
        %526 = vmatpush.xpose.msra.mxu0 0.0
        %527 = vmatpush.xpose.msra.mxu0 0.0
        %528 = vmatpush.xpose.msra.mxu0 0.0
        %529 = vmatpush.xpose.msra.mxu0 0.0
        %530 = vmatpush.xpose.msra.mxu0 0.0
        %531 = vmatpush.xpose.msra.mxu0 0.0
        %532 = vmatpush.xpose.msra.mxu0 0.0
        %533 = vmatpush.xpose.msra.mxu0 0.0
        %v534 = vand.u32 %v462, 4294901760
        %v535 = vsub.f32 %v462, %v534
        %v536 = vand.u32 %v535, 4294901760
        %v537 = vsub.f32 %v535, %v536
        %v538 = vand.u32 %v537, 4294901760
        %539 = vmatpush.xpose.msra.mxu0 %v538
        %v540 = vand.u32 %v459, 4294901760
        %v541 = vsub.f32 %v459, %v540
        %v542 = vand.u32 %v541, 4294901760
        %v543 = vsub.f32 %v541, %v542
        %v544 = vand.u32 %v543, 4294901760
        %545 = vmatpush.xpose.msra.mxu0 %v544
        %v546 = vand.u32 %v491, 4294901760
        %547 = vmatmul.f32.gmra.mxu0 %v546
        %v548 = vpop.f32.mrf.mxu0
        %v549 = vadd.f32 %v518, %v548
        %550 = vdwg.mxu0
        %551 = vmatpush.xpose.msra.mxu0 0.0
        %552 = vmatpush.xpose.msra.mxu0 0.0
        %553 = vmatpush.xpose.msra.mxu0 0.0
        %554 = vmatpush.xpose.msra.mxu0 0.0
        %555 = vmatpush.xpose.msra.mxu0 0.0
        %556 = vmatpush.xpose.msra.mxu0 0.0
        %557 = vmatpush.xpose.msra.mxu0 0.0
        %558 = vmatpush.xpose.msra.mxu0 0.0
        %559 = vmatpush.xpose.msra.mxu0 0.0
        %560 = vmatpush.xpose.msra.mxu0 0.0
        %561 = vmatpush.xpose.msra.mxu0 0.0
        %562 = vmatpush.xpose.msra.mxu0 0.0
        %563 = vmatpush.xpose.msra.mxu0 0.0
        %564 = vmatpush.xpose.msra.mxu0 0.0
        %v565 = vand.u32 %v462, 4294901760
        %v566 = vsub.f32 %v462, %v565
        %567 = vmatpush.xpose.msra.mxu0 %v566
        %v568 = vand.u32 %v459, 4294901760
        %v569 = vsub.f32 %v459, %v568
        %570 = vmatpush.xpose.msra.mxu0 %v569
        %v571 = vand.u32 %v491, 4294901760
        %v572 = vsub.f32 %v491, %v571
        %573 = vmatmul.f32.gmra.mxu0 %v572
        %v574 = vpop.f32.mrf.mxu0
        %v575 = vadd.f32 %v549, %v574
        %576 = vdwg.mxu0
        %577 = vmatpush.xpose.msra.mxu0 0.0
        %578 = vmatpush.xpose.msra.mxu0 0.0
        %579 = vmatpush.xpose.msra.mxu0 0.0
        %580 = vmatpush.xpose.msra.mxu0 0.0
        %581 = vmatpush.xpose.msra.mxu0 0.0
        %582 = vmatpush.xpose.msra.mxu0 0.0
        %583 = vmatpush.xpose.msra.mxu0 0.0
        %584 = vmatpush.xpose.msra.mxu0 0.0
        %585 = vmatpush.xpose.msra.mxu0 0.0
        %586 = vmatpush.xpose.msra.mxu0 0.0
        %587 = vmatpush.xpose.msra.mxu0 0.0
        %588 = vmatpush.xpose.msra.mxu0 0.0
        %589 = vmatpush.xpose.msra.mxu0 0.0
        %590 = vmatpush.xpose.msra.mxu0 0.0
        %v591 = vand.u32 %v462, 4294901760
        %592 = vmatpush.xpose.msra.mxu0 %v591
        %v593 = vand.u32 %v459, 4294901760
        %594 = vmatpush.xpose.msra.mxu0 %v593
        %v595 = vand.u32 %v491, 4294901760
        %v596 = vsub.f32 %v491, %v595
        %v597 = vand.u32 %v596, 4294901760
        %598 = vmatmul.f32.gmra.mxu0 %v597
        %v599 = vpop.f32.mrf.mxu0
        %v600 = vadd.f32 %v575, %v599
        %601 = vdwg.mxu0
        %602 = vmatpush.xpose.msra.mxu0 0.0
        %603 = vmatpush.xpose.msra.mxu0 0.0
        %604 = vmatpush.xpose.msra.mxu0 0.0
        %605 = vmatpush.xpose.msra.mxu0 0.0
        %606 = vmatpush.xpose.msra.mxu0 0.0
        %607 = vmatpush.xpose.msra.mxu0 0.0
        %608 = vmatpush.xpose.msra.mxu0 0.0
        %609 = vmatpush.xpose.msra.mxu0 0.0
        %610 = vmatpush.xpose.msra.mxu0 0.0
        %611 = vmatpush.xpose.msra.mxu0 0.0
        %612 = vmatpush.xpose.msra.mxu0 0.0
        %613 = vmatpush.xpose.msra.mxu0 0.0
        %614 = vmatpush.xpose.msra.mxu0 0.0
        %615 = vmatpush.xpose.msra.mxu0 0.0
        %v616 = vand.u32 %v462, 4294901760
        %v617 = vsub.f32 %v462, %v616
        %v618 = vand.u32 %v617, 4294901760
        %619 = vmatpush.xpose.msra.mxu0 %v618
        %v620 = vand.u32 %v459, 4294901760
        %v621 = vsub.f32 %v459, %v620
        %v622 = vand.u32 %v621, 4294901760
        %623 = vmatpush.xpose.msra.mxu0 %v622
        %v624 = vand.u32 %v491, 4294901760
        %625 = vmatmul.f32.gmra.mxu0 %v624
        %v626 = vpop.f32.mrf.mxu0
        %v627 = vadd.f32 %v600, %v626
        %628 = vdwg.mxu0
        %629 = vmatpush.xpose.msra.mxu0 0.0
        %630 = vmatpush.xpose.msra.mxu0 0.0
        %631 = vmatpush.xpose.msra.mxu0 0.0
        %632 = vmatpush.xpose.msra.mxu0 0.0
        %633 = vmatpush.xpose.msra.mxu0 0.0
        %634 = vmatpush.xpose.msra.mxu0 0.0
        %635 = vmatpush.xpose.msra.mxu0 0.0
        %636 = vmatpush.xpose.msra.mxu0 0.0
        %637 = vmatpush.xpose.msra.mxu0 0.0
        %638 = vmatpush.xpose.msra.mxu0 0.0
        %639 = vmatpush.xpose.msra.mxu0 0.0
        %640 = vmatpush.xpose.msra.mxu0 0.0
        %641 = vmatpush.xpose.msra.mxu0 0.0
        %642 = vmatpush.xpose.msra.mxu0 0.0
        %v643 = vand.u32 %v462, 4294901760
        %644 = vmatpush.xpose.msra.mxu0 %v643
        %v645 = vand.u32 %v459, 4294901760
        %646 = vmatpush.xpose.msra.mxu0 %v645
        %v647 = vand.u32 %v491, 4294901760
        %648 = vmatmul.f32.gmra.mxu0 %v647
        %v649 = vpop.f32.mrf.mxu0
        %v650 = vadd.f32 %v627, %v649
        %651 = vdwg.mxu0
        %v653 = vsel %vm431, %v423, 0
        %655 = vmatpush.xpose.msra.mxu0 0.0
        %656 = vmatpush.xpose.msra.mxu0 0.0
        %657 = vmatpush.xpose.msra.mxu0 0.0
        %658 = vmatpush.xpose.msra.mxu0 0.0
        %659 = vmatpush.xpose.msra.mxu0 0.0
        %660 = vmatpush.xpose.msra.mxu0 0.0
        %661 = vmatpush.xpose.msra.mxu0 0.0
        %662 = vmatpush.xpose.msra.mxu0 0.0
        %663 = vmatpush.xpose.msra.mxu0 0.0
        %664 = vmatpush.xpose.msra.mxu0 0.0
        %665 = vmatpush.xpose.msra.mxu0 0.0
        %666 = vmatpush.xpose.msra.mxu0 0.0
        %667 = vmatpush.xpose.msra.mxu0 0.0
        %668 = vmatpush.xpose.msra.mxu0 0.0
        %v669 = vand.u32 %v462, 4294901760
        %670 = vmatpush.xpose.msra.mxu0 %v669
        %v671 = vand.u32 %v459, 4294901760
        %672 = vmatpush.xpose.msra.mxu0 %v671
        %v673 = vand.u32 %v653, 4294901760
        %v674 = vsub.f32 %v653, %v673
        %v675 = vand.u32 %v674, 4294901760
        %v676 = vsub.f32 %v674, %v675
        %v677 = vand.u32 %v676, 4294901760
        %678 = vmatmul.f32.gmra.mxu0 %v677
        %v679 = vpop.f32.mrf.mxu0
        %v680 = vadd.f32 0.0, %v679
        %681 = vdwg.mxu0
        %682 = vmatpush.xpose.msra.mxu0 0.0
        %683 = vmatpush.xpose.msra.mxu0 0.0
        %684 = vmatpush.xpose.msra.mxu0 0.0
        %685 = vmatpush.xpose.msra.mxu0 0.0
        %686 = vmatpush.xpose.msra.mxu0 0.0
        %687 = vmatpush.xpose.msra.mxu0 0.0
        %688 = vmatpush.xpose.msra.mxu0 0.0
        %689 = vmatpush.xpose.msra.mxu0 0.0
        %690 = vmatpush.xpose.msra.mxu0 0.0
        %691 = vmatpush.xpose.msra.mxu0 0.0
        %692 = vmatpush.xpose.msra.mxu0 0.0
        %693 = vmatpush.xpose.msra.mxu0 0.0
        %694 = vmatpush.xpose.msra.mxu0 0.0
        %695 = vmatpush.xpose.msra.mxu0 0.0
        %v696 = vand.u32 %v462, 4294901760
        %v697 = vsub.f32 %v462, %v696
        %v698 = vand.u32 %v697, 4294901760
        %v699 = vsub.f32 %v697, %v698
        %v700 = vand.u32 %v699, 4294901760
        %701 = vmatpush.xpose.msra.mxu0 %v700
        %v702 = vand.u32 %v459, 4294901760
        %v703 = vsub.f32 %v459, %v702
        %v704 = vand.u32 %v703, 4294901760
        %v705 = vsub.f32 %v703, %v704
        %v706 = vand.u32 %v705, 4294901760
        %707 = vmatpush.xpose.msra.mxu0 %v706
        %v708 = vand.u32 %v653, 4294901760
        %709 = vmatmul.f32.gmra.mxu0 %v708
        %v710 = vpop.f32.mrf.mxu0
        %v711 = vadd.f32 %v680, %v710
        %712 = vdwg.mxu0
        %713 = vmatpush.xpose.msra.mxu0 0.0
        %714 = vmatpush.xpose.msra.mxu0 0.0
        %715 = vmatpush.xpose.msra.mxu0 0.0
        %716 = vmatpush.xpose.msra.mxu0 0.0
        %717 = vmatpush.xpose.msra.mxu0 0.0
        %718 = vmatpush.xpose.msra.mxu0 0.0
        %719 = vmatpush.xpose.msra.mxu0 0.0
        %720 = vmatpush.xpose.msra.mxu0 0.0
        %721 = vmatpush.xpose.msra.mxu0 0.0
        %722 = vmatpush.xpose.msra.mxu0 0.0
        %723 = vmatpush.xpose.msra.mxu0 0.0
        %724 = vmatpush.xpose.msra.mxu0 0.0
        %725 = vmatpush.xpose.msra.mxu0 0.0
        %726 = vmatpush.xpose.msra.mxu0 0.0
        %v727 = vand.u32 %v462, 4294901760
        %v728 = vsub.f32 %v462, %v727
        %729 = vmatpush.xpose.msra.mxu0 %v728
        %v730 = vand.u32 %v459, 4294901760
        %v731 = vsub.f32 %v459, %v730
        %732 = vmatpush.xpose.msra.mxu0 %v731
        %v733 = vand.u32 %v653, 4294901760
        %v734 = vsub.f32 %v653, %v733
        %735 = vmatmul.f32.gmra.mxu0 %v734
        %v736 = vpop.f32.mrf.mxu0
        %v737 = vadd.f32 %v711, %v736
        %738 = vdwg.mxu0
        %739 = vmatpush.xpose.msra.mxu0 0.0
        %740 = vmatpush.xpose.msra.mxu0 0.0
        %741 = vmatpush.xpose.msra.mxu0 0.0
        %742 = vmatpush.xpose.msra.mxu0 0.0
        %743 = vmatpush.xpose.msra.mxu0 0.0
        %744 = vmatpush.xpose.msra.mxu0 0.0
        %745 = vmatpush.xpose.msra.mxu0 0.0
        %746 = vmatpush.xpose.msra.mxu0 0.0
        %747 = vmatpush.xpose.msra.mxu0 0.0
        %748 = vmatpush.xpose.msra.mxu0 0.0
        %749 = vmatpush.xpose.msra.mxu0 0.0
        %750 = vmatpush.xpose.msra.mxu0 0.0
        %751 = vmatpush.xpose.msra.mxu0 0.0
        %752 = vmatpush.xpose.msra.mxu0 0.0
        %v753 = vand.u32 %v462, 4294901760
        %754 = vmatpush.xpose.msra.mxu0 %v753
        %v755 = vand.u32 %v459, 4294901760
        %756 = vmatpush.xpose.msra.mxu0 %v755
        %v757 = vand.u32 %v653, 4294901760
        %v758 = vsub.f32 %v653, %v757
        %v759 = vand.u32 %v758, 4294901760
        %760 = vmatmul.f32.gmra.mxu0 %v759
        %v761 = vpop.f32.mrf.mxu0
        %v762 = vadd.f32 %v737, %v761
        %763 = vdwg.mxu0
        %764 = vmatpush.xpose.msra.mxu0 0.0
        %765 = vmatpush.xpose.msra.mxu0 0.0
        %766 = vmatpush.xpose.msra.mxu0 0.0
        %767 = vmatpush.xpose.msra.mxu0 0.0
        %768 = vmatpush.xpose.msra.mxu0 0.0
        %769 = vmatpush.xpose.msra.mxu0 0.0
        %770 = vmatpush.xpose.msra.mxu0 0.0
        %771 = vmatpush.xpose.msra.mxu0 0.0
        %772 = vmatpush.xpose.msra.mxu0 0.0
        %773 = vmatpush.xpose.msra.mxu0 0.0
        %774 = vmatpush.xpose.msra.mxu0 0.0
        %775 = vmatpush.xpose.msra.mxu0 0.0
        %776 = vmatpush.xpose.msra.mxu0 0.0
        %777 = vmatpush.xpose.msra.mxu0 0.0
        %v778 = vand.u32 %v462, 4294901760
        %v779 = vsub.f32 %v462, %v778
        %v780 = vand.u32 %v779, 4294901760
        %781 = vmatpush.xpose.msra.mxu0 %v780
        %v782 = vand.u32 %v459, 4294901760
        %v783 = vsub.f32 %v459, %v782
        %v784 = vand.u32 %v783, 4294901760
        %785 = vmatpush.xpose.msra.mxu0 %v784
        %v786 = vand.u32 %v653, 4294901760
        %787 = vmatmul.f32.gmra.mxu0 %v786
        %v788 = vpop.f32.mrf.mxu0
        %v789 = vadd.f32 %v762, %v788
        %790 = vdwg.mxu0
        %791 = vmatpush.xpose.msra.mxu0 0.0
        %792 = vmatpush.xpose.msra.mxu0 0.0
        %793 = vmatpush.xpose.msra.mxu0 0.0
        %794 = vmatpush.xpose.msra.mxu0 0.0
        %795 = vmatpush.xpose.msra.mxu0 0.0
        %796 = vmatpush.xpose.msra.mxu0 0.0
        %797 = vmatpush.xpose.msra.mxu0 0.0
        %798 = vmatpush.xpose.msra.mxu0 0.0
        %799 = vmatpush.xpose.msra.mxu0 0.0
        %800 = vmatpush.xpose.msra.mxu0 0.0
        %801 = vmatpush.xpose.msra.mxu0 0.0
        %802 = vmatpush.xpose.msra.mxu0 0.0
        %803 = vmatpush.xpose.msra.mxu0 0.0
        %804 = vmatpush.xpose.msra.mxu0 0.0
        %v805 = vand.u32 %v462, 4294901760
        %806 = vmatpush.xpose.msra.mxu0 %v805
        %v807 = vand.u32 %v459, 4294901760
        %808 = vmatpush.xpose.msra.mxu0 %v807
        %v809 = vand.u32 %v653, 4294901760
        %810 = vmatmul.f32.gmra.mxu0 %v809
        %v811 = vpop.f32.mrf.mxu0
        %v812 = vadd.f32 %v789, %v811
        %813 = vdwg.mxu0
        %815 = vset.pattern.permute.xlu0 0
        %816 = vperm.xlu0 %815, %v429
        %v817 = vpop.permute.xlu0 %816
        %v819 = vsub.f32 %v817, %v812
        %vm820 = vcmask 125952
        %v821 = vsel %vm820, %v650, inf
        %v822 = vrot.slane %v821, 4
        %v823 = vmin.f32 %v821, %v822
        %v824 = vrot.slane %v823, 2
        %v825 = vmin.f32 %v823, %v824
        %v826 = vrot.slane %v825, 1
        %v827 = vmin.f32 %v825, %v826
        %v828 = vmin.f32 %v827, %v819
        %vm829 = vcmp.ge.f32.partialorder %v828, 0.0
        %v830 = vsel %vm829, 1.0, 0.0
        %v832 = vperm.slane %v424, 0
        %vm834 = vcmp.ne.f32.partialorder %v425, %v832
        %vm835 = vcmp.ne.f32.partialorder %v426, %v832
        %v836 = vsel %vm834, 1.0, 0.0
        %v837 = vsel %vm835, 1.0, 0.0
        %v839 = vsel %vm431, 1.0, 0
        %v842 = vsel %vm431, %v836, 0
        %v845 = vsel %vm431, %v837, 0
        %847 = vmatpush.xpose.msra.mxu0 0.0
        %848 = vmatpush.xpose.msra.mxu0 0.0
        %849 = vmatpush.xpose.msra.mxu0 0.0
        %850 = vmatpush.xpose.msra.mxu0 0.0
        %851 = vmatpush.xpose.msra.mxu0 0.0
        %852 = vmatpush.xpose.msra.mxu0 0.0
        %853 = vmatpush.xpose.msra.mxu0 0.0
        %854 = vmatpush.xpose.msra.mxu0 0.0
        %855 = vmatpush.xpose.msra.mxu0 0.0
        %856 = vmatpush.xpose.msra.mxu0 0.0
        %857 = vmatpush.xpose.msra.mxu0 0.0
        %858 = vmatpush.xpose.msra.mxu0 0.0
        %859 = vmatpush.xpose.msra.mxu0 0.0
        %860 = vmatpush.xpose.msra.mxu0 0.0
        %861 = vmatpush.xpose.msra.mxu0 %v845
        %862 = vmatpush.xpose.msra.mxu0 %v842
        %863 = vmatmul.f32.gmra.mxu0 %v839
        %v864 = vpop.f32.mrf.mxu0
        %v865 = vadd.f32 0.0, %v864
        %866 = vdwg.mxu0
        %vm867 = vcmp.gt.f32.partialorder %v865, 0.5
        %v868 = vsel %vm867, 1.0, 0.0
        %v869 = vmul.f32 %v868, %v830
        %v870 = vadd.f32 %v484, 0.1
        %v871 = vmax.f32 %v870, 0.0
        %v872 = vmul.f32 %v484, -1.0
        %vm873 = vcmask 130048
        %v874 = vsel %vm873, %v872, -inf
        %v875 = vrot.slane %v874, 4
        %v876 = vmax.f32 %v874, %v875
        %v877 = vrot.slane %v876, 2
        %v878 = vmax.f32 %v876, %v877
        %v879 = vrot.slane %v878, 1
        %v880 = vmax.f32 %v878, %v879
        %v881 = vsub.f32 %v872, %v880
        %v882 = vmul.f32 %v881, 1.442695
        %v883 = vpow.pop %v882
        %v884 = vmul.f32 %v883, %v871
        %v885 = vsel %vm873, %v884, 0.0
        %v886 = vrot.slane %v885, 4
        %v887 = vadd.f32 %v885, %v886
        %v888 = vrot.slane %v887, 2
        %v889 = vadd.f32 %v887, %v888
        %v890 = vrot.slane %v889, 1
        %v891 = vadd.f32 %v889, %v890
        %v892 = vsel %vm873, %v883, 0.0
        %v893 = vrot.slane %v892, 4
        %v894 = vadd.f32 %v892, %v893
        %v895 = vrot.slane %v894, 2
        %v896 = vadd.f32 %v894, %v895
        %v897 = vrot.slane %v896, 1
        %v898 = vadd.f32 %v896, %v897
        %v899 = vrcp.pop %v898
        %v900 = vmul.f32 %v891, %v899
        %v901 = vmul.f32 %v869, %v900
        %vm902 = vcmask 122880
        %v903 = vsel %vm902, %v901, 0.0
        %904 = vadd.xlane.f32.xlu0 %v903
        %v905 = vpop.xlane.xlu0 %904
        %v906 = vsel %vm902, %v869, 0.0
        %907 = vadd.xlane.f32.xlu0 %v906
        %v908 = vpop.xlane.xlu0 %907
        %p909 = scmp.eq.s32.totalorder %s31, 0
        // Predicated region
        $region57: #{tpu_custom_call.1} parent=43 // pred_check
          %p910 = pneg %p909
        $region58: #{tpu_custom_call.1} parent=43 // pred_check_branch
          %912 = sbr.rel (%p910) target = $region60
        $region59: #{tpu_custom_call.1} parent=43 // pred_region
          %vm913 = vcmask 0
          %914 = vst.msk [vmem:[#allocation2] sm:$0x1] %vm913, 0.0
          %915 = vst.msk [vmem:[#allocation3] sm:$0x1] %vm913, 0.0
        $region60: #{tpu_custom_call.1} parent=43 // pred_fallthru
          _
        %v916 = vld [vmem:[#allocation2] sm:$0x1]
        %v917 = vadd.f32 %v916, %v905
        %vm918 = vcmask 0
        %919 = vst.msk [vmem:[#allocation2] sm:$0x1] %vm918, %v917
        %v920 = vld [vmem:[#allocation3] sm:$0x1]
        %v921 = vadd.f32 %v920, %v908
        %922 = vst.msk [vmem:[#allocation3] sm:$0x1] %vm918, %v921
        // Predicated region
        $region61: #{tpu_custom_call.1} parent=43 // pred_check
          %p923 = pneg %p909
        $region62: #{tpu_custom_call.1} parent=43 // pred_check_branch
          %925 = sbr.rel (%p923) target = $region64
        $region63: #{tpu_custom_call.1} parent=43 // pred_region
          %v926 = vld [vmem:[#allocation2] sm:$0x1]
          %v927 = vld [vmem:[#allocation3] sm:$0x1]
          %v928 = vadd.f32 %v927, 1.1920929e-07
          %v929 = vrcp.pop %v928
          %v930 = vmul.f32 %v926, %v929
          %v931 = vmul.f32 %v421, %v832
          %v932 = vsel %vm431, %v931, 0.0
          %933 = vadd.xlane.f32.xlu0 %v932
          %v934 = vpop.xlane.xlu0 %933
          %v935 = vadd.f32 %v934, %v427
          %v936 = vmul.f32 %v935, %v444
          %v937 = vsub.f32 0.1, %v936
          %v938 = vmax.f32 %v937, 0.0
          %vm939 = vcmask 7168
          %v940 = vsel %vm939, %v938, 0.0
          %v941 = vrot.slane %v940, 4
          %v942 = vadd.f32 %v940, %v941
          %v943 = vrot.slane %v942, 2
          %v944 = vadd.f32 %v942, %v943
          %v945 = vrot.slane %v944, 1
          %v946 = vadd.f32 %v944, %v945
          %v947 = vmul.f32 %v946, 0.125
          %v948 = vmul.f32 %v422, %v422
          %vm949 = vcmask 257024
          %v950 = vsel %vm949, %v948, 0.0
          %951 = vadd.xlane.f32.xlu0 %v950
          %v952 = vpop.xlane.xlu0 %951
          %v953 = vmax.f32 %v952, 1e-24
          %v954 = vrsqrt.pop %v953
          %v955 = vmul.f32 %v954, %v953
          %v956 = vmul.f32 %v955, %v954
          %v957 = vmul.f32 0.5, %v956
          %v958 = vsub.f32 1.5, %v957
          %v959 = vmul.f32 %v954, %v958
          %vm960 = vweird.f32 %v953
          %vm961 = vweird.f32 %v954
          %vm962 = vmor %vm960, %vm961
          %v963 = vsel %vm962, %v954, %v959
          %v964 = vmax.f32 %v449, 1e-24
          %v965 = vrsqrt.pop %v964
          %v966 = vmul.f32 %v965, %v964
          %v967 = vmul.f32 %v966, %v965
          %v968 = vmul.f32 0.5, %v967
          %v969 = vsub.f32 1.5, %v968
          %v970 = vmul.f32 %v965, %v969
          %vm971 = vweird.f32 %v964
          %vm972 = vweird.f32 %v965
          %vm973 = vmor %vm971, %vm972
          %v974 = vsel %vm973, %v965, %v970
          %v975 = vmul.f32 %v421, %v444
          %v976 = vsel %vm431, %v975, 0.0
          %v977 = vrot.slane %v976, 4
          %v978 = vadd.f32 %v976, %v977
          %v979 = vrot.slane %v978, 2
          %v980 = vadd.f32 %v978, %v979
          %v981 = vrot.slane %v980, 1
          %v982 = vadd.f32 %v980, %v981
          %v983 = vmul.f32 %v422, %v963
          %v984 = vsel %vm949, %v983, 0.0
          %v985 = vrot.slane %v984, 4
          %v986 = vadd.f32 %v984, %v985
          %v987 = vrot.slane %v986, 2
          %v988 = vadd.f32 %v986, %v987
          %v989 = vrot.slane %v988, 1
          %v990 = vadd.f32 %v988, %v989
          %v991 = vadd.f32 %v982, %v990
          %v992 = vmul.f32 %v423, %v974
          %v993 = vsub.f32 %v991, %v992
          %v994 = vmul.f32 %v993, 0.07692308
          %v995 = vmul.f32 %v994, %v994
          %v996 = vsel %vm446, %v995, 0.0
          %997 = vadd.xlane.f32.xlu0 %v996
          %v998 = vpop.xlane.xlu0 %997
          %v999 = vmul.f32 %v998, 0.03125
          %v1000 = vlaneseq
          %v1001 = vand.u32 %v1000, 127
          %vm1002 = vcmp.eq.s32.totalorder %v1001, 0
          %1004 = vset.pattern.permute.xlu0 0
          %1005 = vperm.xlu0 %1004, %v947
          %v1006 = vpop.permute.xlu0 %1005
          %v1008 = vsel %vm1002, %v1006, 0.0
          %vm1009 = vcmp.eq.s32.totalorder %v1001, 1
          %1011 = vset.pattern.permute.xlu0 0
          %1012 = vperm.xlu0 %1011, %v930
          %v1013 = vpop.permute.xlu0 %1012
          %v1015 = vperm.slane %v1013, 0
          %v1016 = vsel %vm1009, %v1015, 0.0
          %v1017 = vadd.f32 %v1008, %v1016
          %vm1018 = vcmp.eq.s32.totalorder %v1001, 2
          %v1019 = vsel %vm1018, %v999, 0.0
          %v1020 = vadd.f32 %v1017, %v1019
          %1021 = vst [vmem:[%s402] sm:$0x1] %v1020
        $region64: #{tpu_custom_call.1} parent=43 // pred_fallthru
          _
        %s1022 = sand.u32 %s204, 1
        %s1023 = scalar_lea.sflag [#allocation6], %s1022
        %s1024 = sand.u32 %s204, 1
        %s1025 = scalar_lea.vmem [#allocation10], %s1024
        // Predicated region
        $region65: #{tpu_custom_call.1} parent=43 // pred_check
          %p1026 = pneg %p214
        $region66: #{tpu_custom_call.1} parent=43 // pred_check_branch
          %1028 = sbr.rel (%p1026) target = $region68
        $region67: #{tpu_custom_call.1} parent=43 // pred_region
          %1030 = vsyncadd %s1023, 0
          %s1031 = scalar_lea.hbm %s6, %s30
          %s1033 = sshll.u32 %s1025, 4
          %s1034 = int_to_ptr.vmem [resolvable:$true] %s1033
          %s1035 = sshll.u32 %s1031, 4
          %s1036 = int_to_ptr.hbm [resolvable:$true] %s1035
          %1038 = dma.vmem_to_hbm [thread:$0]  %s1034, 16, %s1036, %s1023
        $region68: #{tpu_custom_call.1} parent=43 // pred_fallthru
          _
      $region44: #{tpu_custom_call.1} parent=5 // pred_fallthru
        _
      %p1039 = scmp.le.s32.totalorder 2, %s21
      // Predicated region
      $region69: #{tpu_custom_call.1} parent=5 // pred_check
        %p1040 = pneg %p1039
      $region70: #{tpu_custom_call.1} parent=5 // pred_check_branch
        %1042 = sbr.rel (%p1040) target = $region72
      $region71: #{tpu_custom_call.1} parent=5 // pred_region
        %s1043 = ssub.s32 %s21, 2
        // Predicated region
        $region73: #{tpu_custom_call.1} parent=71 // pred_check
          %p1044 = pneg %p220
        $region74: #{tpu_custom_call.1} parent=71 // pred_check_branch
          %1046 = sbr.rel (%p1044) target = $region76
        $region75: #{tpu_custom_call.1} parent=71 // pred_region
          %s1047 = sand.u32 %s205, 1
          %s1048 = scalar_lea.sflag [#allocation6], %s1047
          %s1049 = sand.u32 %s205, 1
          %s1050 = scalar_lea.vmem [#allocation10], %s1049
          %1052 = dma.done %s1048, 16
        $region76: #{tpu_custom_call.1} parent=71 // pred_fallthru
          _
      $region72: #{tpu_custom_call.1} parent=5 // pred_fallthru
        _
    $region6: #{tpu_custom_call.1} parent=1 // loop_footer
      %s25 = sadd.s32 1, %s21
    $region7: #{tpu_custom_call.1} parent=1 // loop_footer_branch
      %20 = sbr.rel target = $region3
    $region8: #{tpu_custom_call.1} parent=1 // loop_exit
      _
    %1053 = vsyncpa [#allocation5], 1
    %s1054 = scalar_lea.sflag [#allocation5], 1
    %1055 = vsyncpa %s1054, 1
    %1056 = vsyncpa [#allocation8], 1
    %s1057 = scalar_lea.sflag [#allocation8], 1
    %1058 = vsyncpa %s1057, 1
    %1059 = vsyncpa [#allocation6], 1
    %s1060 = scalar_lea.sflag [#allocation6], 1
    %1061 = vsyncpa %s1060, 1

</llo_original>
